<compile_context>
chip_gen: v5e
topology: v5e:2x2
jax: 0.10.0
libtpu: 0.0.40
codegen_flags: <defaults>
</compile_context>

<pallas_src>
import math
from functools import partial

import jax
import jax.numpy as jnp
from jax.experimental import pallas as pl
from jax.experimental.pallas import tpu as pltpu


def _vmem_capacity_bytes():
    """Physical VMEM of the attached TPU; conservative fallback (v7x = 64 MiB)."""
    try:
        return int(pltpu.get_tpu_info().vmem_capacity_bytes)
    except Exception:
        return 64 * 1024 * 1024


def _fused_vmem_bytes(bt, seq, dm, heads):
    """Rough per-step VMEM footprint of the fused kernel for a (bt, seq, dm) tile."""
    d_k = dm // heads
    io = 2 * (3 + 1) * bt * seq * dm * 4            # double-buffered xq/xk/xv + out (f32)
    w = 2 * 4 * dm * dm * 2 + 2 * 4 * dm * 4        # double-buffered bf16 weights + f32 biases
    inter = 3 * bt * seq * dm * 2                   # q2/k2/v2 (bf16)
    inter += bt * seq * dm * 4                      # f32 output-projection accumulator
    inter += 2 * bt * seq * seq * 4                 # dense scores + probs (one head live)
    inter += bt * seq * d_k * 4                     # per-head attention output
    return io + w + inter


def _pick_batch_tile(bs, seq, dm, heads, budget):
    """Largest divisor of bs that fits the VMEM budget, preferring >=2 grid steps
    (DMA/compute pipelining + v7x megacore sharding of the 'parallel' axis)."""
    divisors = [d for d in range(bs, 0, -1) if bs % d == 0]
    fitting = [d for d in divisors if _fused_vmem_bytes(d, seq, dm, heads) <= budget]
    if not fitting:
        fitting = [1]
    multi_step = [d for d in fitting if bs // d >= 2]
    return multi_step[0] if multi_step else fitting[0]


# ---------------------------------------------------------------------------
# Fused kernel: QKV projection + all-heads attention + output projection
#   out = ( sum_h softmax(q_h k_h^T / sqrt(d_k)) v_h @ Wo[h*d_k:(h+1)*d_k, :] ) + bo
# ---------------------------------------------------------------------------
def _mha_fused_kernel(xq_ref, xk_ref, xv_ref,
                      wq_ref, wk_ref, wv_ref, wo_ref,
                      bq_ref, bk_ref, bv_ref, bo_ref,
                      o_ref, *, heads, d_k, scale):
    bt, seq, dm = xq_ref.shape
    rows = bt * seq

    def proj(x_ref, w_ref, b_ref):
        # (bt*seq, dm) bf16 MXU operand, f32 accumulate + bias; bf16 intermediate
        # (it is only ever consumed as an MXU operand again).
        x = x_ref[...].reshape(rows, dm).astype(jnp.bfloat16)
        y = jnp.dot(x, w_ref[...], preferred_element_type=jnp.float32) + b_ref[...]
        return y.astype(jnp.bfloat16).reshape(bt, seq, dm)

    q2 = proj(xq_ref, wq_ref, bq_ref)
    k2 = proj(xk_ref, wk_ref, bk_ref)
    v2 = proj(xv_ref, wv_ref, bv_ref)

    # Per-head attention with the output projection accumulated per head — no
    # lane-dim concat, second GEMM runs at full N = d_model width.
    # TODO(synk): batching heads into one dot_general (head-major (bt*h, seq, d_k)
    # layout) would avoid the d_k-wide lane slices / K=d_k MXU padding, but needs a
    # sublane-involving transpose whose Mosaic lowering is not guaranteed here.
    # TODO(synk): for long sequences this dense seq x seq softmax should become a
    # KV-tiled flash-style online softmax (m/l/acc scratch + pl.when) to bound VMEM.
    acc = jnp.zeros((rows, dm), jnp.float32)
    for hi in range(heads):
        lo, hi_ = hi * d_k, (hi + 1) * d_k
        qh, kh, vh = q2[:, :, lo:hi_], k2[:, :, lo:hi_], v2[:, :, lo:hi_]
        # Batched scores without materializing k^T.
        s = jnp.einsum("bqd,bkd->bqk", qh, kh,
                       preferred_element_type=jnp.float32) * scale
        # Numerically stable softmax, exact division (matches F.softmax).
        s = s - jnp.max(s, axis=-1, keepdims=True)
        p = jnp.exp(s)
        p = p / jnp.sum(p, axis=-1, keepdims=True)
        # TODO(synk): training-mode dropout(p=0.1) on the probs would need
        # pltpu.prng_seed + pltpu.prng_random_bits masking; eval mode is identity.
        oh = jnp.einsum("bqk,bkd->bqd", p.astype(jnp.bfloat16), vh,
                        preferred_element_type=jnp.float32)
        # (rows, d_k) @ (d_k, dm): Wo row-slice is a cheap sublane slice.
        acc = acc + jnp.dot(oh.reshape(rows, d_k).astype(jnp.bfloat16),
                            wo_ref[lo:hi_, :], preferred_element_type=jnp.float32)

    # Lane-dense store: last dim = d_model.
    o_ref[...] = (acc + bo_ref[...]).reshape(bt, seq, dm)


def mha_forward(xq, xk, xv, wq, wk, wv, wo, bq, bk, bv, bo, heads, d_k):
    bs, seq, dm = xq.shape
    cap = _vmem_capacity_bytes()
    # ~96-100 MiB on 128 MiB parts (v5e/v6e), ~48 MiB on 64 MiB parts (v7x).
    budget = max(32 * 1024 * 1024, min(int(0.75 * cap), 100 * 1024 * 1024))
    bt = _pick_batch_tile(bs, seq, dm, heads, budget)
    grid = (bs // bt,)

    act_spec = pl.BlockSpec((bt, seq, dm), lambda i: (i, 0, 0))
    w_spec = pl.BlockSpec((dm, dm), lambda i: (0, 0))   # weights stay VMEM-resident
    b_spec = pl.BlockSpec((1, dm), lambda i: (0, 0))
    scale = 1.0 / math.sqrt(d_k)

    cost = pl.CostEstimate(
        flops=int(3 * 2 * bs * seq * dm * dm            # QKV projections
                  + 4 * bs * seq * seq * dm             # QK^T and PV over all heads
                  + 2 * bs * seq * dm * dm),            # output projection
        transcendentals=int(bs * heads * seq * seq),
        bytes_accessed=int(4 * 3 * bs * seq * dm        # f32 activations in
                           + 2 * 4 * dm * dm            # bf16 weights
                           + 4 * 4 * dm                 # f32 biases
                           + 4 * bs * seq * dm),        # f32 output
    )

    return pl.pallas_call(
        partial(_mha_fused_kernel, heads=heads, d_k=d_k, scale=scale),
        out_shape=jax.ShapeDtypeStruct((bs, seq, dm), jnp.float32),
        grid_spec=pltpu.PrefetchScalarGridSpec(
            num_scalar_prefetch=0,
            grid=grid,
            in_specs=[act_spec, act_spec, act_spec,
                      w_spec, w_spec, w_spec, w_spec,
                      b_spec, b_spec, b_spec, b_spec],
            out_specs=act_spec,
        ),
        compiler_params=pltpu.CompilerParams(
            dimension_semantics=("parallel",),
            vmem_limit_bytes=budget,
        ),
        cost_estimate=cost,
    )(xq, xk, xv, wq, wk, wv, wo,
      bq.reshape(1, dm), bk.reshape(1, dm), bv.reshape(1, dm), bo.reshape(1, dm))


# ---------------------------------------------------------------------------
# Module wrapper (parameter init only — no wrapper-side reshapes/transposes)
# ---------------------------------------------------------------------------
class MultiHeadAttentionPallas:
    def __init__(self, heads, d_model, key, dropout=0.1):
        assert d_model % heads == 0
        self.h = heads
        self.d_model = d_model
        self.d_k = d_model // heads
        self.dropout_p = dropout  # eval mode: identity
        ks = jax.random.split(key, 8)
        bound = 1.0 / math.sqrt(d_model)

        def init_linear(kw, kb):
            # Stored transposed (d_in, d_out) so the kernel computes y = x @ W + b.
            # Weights kept in bf16 (MXU operand dtype; halves HBM/VMEM traffic).
            w = jax.random.uniform(kw, (d_model, d_model), jnp.float32, -bound, bound)
            b = jax.random.uniform(kb, (d_model,), jnp.float32, -bound, bound)
            return w.astype(jnp.bfloat16), b

        self.wq, self.bq = init_linear(ks[0], ks[1])
        self.wk, self.bk = init_linear(ks[2], ks[3])
        self.wv, self.bv = init_linear(ks[4], ks[5])
        self.wo, self.bo = init_linear(ks[6], ks[7])

    def __call__(self, q, k, v, mask=None):
        if mask is not None:
            # TODO(synk): masked_fill(-inf) before softmax not implemented (module is
            # only exercised with mask=None here).
            raise NotImplementedError("attention mask not supported by Pallas kernel")
        # TODO(synk): when q is k is v (self-attention), the same activation tile is
        # DMA'd three times per step; a single-x kernel variant would cut input traffic 3x.
        return mha_forward(q, k, v, self.wq, self.wk, self.wv, self.wo,
                           self.bq, self.bk, self.bv, self.bo, self.h, self.d_k)


# ---------------------------------------------------------------------------
# Pure-JAX reference with the same bf16-operand / f32-accumulate matmul math
# ---------------------------------------------------------------------------
def reference_forward(mha, q, k, v):
    bs, seq, dm = q.shape
    h, dk = mha.h, mha.d_k

    def lin(x, w, b):
        return jnp.dot(x.astype(jnp.bfloat16), w.astype(jnp.bfloat16),
                       preferred_element_type=jnp.float32) + b

    qh = lin(q, mha.wq, mha.bq).reshape(bs, seq, h, dk).transpose(0, 2, 1, 3)
    kh = lin(k, mha.wk, mha.bk).reshape(bs, seq, h, dk).transpose(0, 2, 1, 3)
    vh = lin(v, mha.wv, mha.bv).reshape(bs, seq, h, dk).transpose(0, 2, 1, 3)
    s = jnp.einsum("bhqd,bhkd->bhqk",
                   qh.astype(jnp.bfloat16), kh.astype(jnp.bfloat16),
                   preferred_element_type=jnp.float32) / math.sqrt(dk)
    p = jax.nn.softmax(s, axis=-1)
    o = jnp.einsum("bhqk,bhkd->bhqd",
                   p.astype(jnp.bfloat16), vh.astype(jnp.bfloat16),
                   preferred_element_type=jnp.float32)
    concat = o.transpose(0, 2, 1, 3).reshape(bs, seq, dm)
    return lin(concat, mha.wo, mha.bo)


if __name__ == "__main__":
    key = jax.random.PRNGKey(0)
    k_params, k_q, k_k, k_v = jax.random.split(key, 4)

    bs, seq, d_model, heads = 2, 8, 32, 4
    mha = MultiHeadAttentionPallas(heads, d_model, k_params)

    q = jax.random.normal(k_q, (bs, seq, d_model), jnp.float32)
    k = jax.random.normal(k_k, (bs, seq, d_model), jnp.float32)
    v = jax.random.normal(k_v, (bs, seq, d_model), jnp.float32)

    out = jax.block_until_ready(mha(q, k, v, mask=None))
    ref = jax.block_until_ready(reference_forward(mha, q, k, v))

    assert out.shape == (bs, seq, d_model)
    assert jnp.allclose(out, ref, atol=2e-2, rtol=2e-2), "mismatch vs reference"

    print("KERNEL_OK")
</pallas_src>

<mosaic_0001>
module attributes {stable_mosaic.version = 11 : i64} {
  func.func @_mha_fused_kernel(%arg0: i32, %arg1: memref<1x8x32xf32, #tpu.memory_space<vmem>>, %arg2: memref<1x8x32xf32, #tpu.memory_space<vmem>>, %arg3: memref<1x8x32xf32, #tpu.memory_space<vmem>>, %arg4: memref<32x32xbf16, #tpu.memory_space<vmem>>, %arg5: memref<32x32xbf16, #tpu.memory_space<vmem>>, %arg6: memref<32x32xbf16, #tpu.memory_space<vmem>>, %arg7: memref<32x32xbf16, #tpu.memory_space<vmem>>, %arg8: memref<1x32xf32, #tpu.memory_space<vmem>>, %arg9: memref<1x32xf32, #tpu.memory_space<vmem>>, %arg10: memref<1x32xf32, #tpu.memory_space<vmem>>, %arg11: memref<1x32xf32, #tpu.memory_space<vmem>>, %arg12: memref<1x8x32xf32, #tpu.memory_space<vmem>>) attributes {dimension_semantics = [#tpu.dimension_semantics<parallel>], iteration_bounds = array<i64: 2>, scalar_prefetch = 0 : i64, scratch_operands = 0 : i64, tpu.core_type = #tpu.core_type<tc>, window_params = [{transform_indices = @transform_0, window_bounds = array<i64: 1, 8, 32>}, {transform_indices = @transform_1, window_bounds = array<i64: 1, 8, 32>}, {transform_indices = @transform_2, window_bounds = array<i64: 1, 8, 32>}, {pipeline_mode = #tpu.pipeline_mode<synchronous>, transform_indices = @transform_3, window_bounds = array<i64: 32, 32>}, {pipeline_mode = #tpu.pipeline_mode<synchronous>, transform_indices = @transform_4, window_bounds = array<i64: 32, 32>}, {pipeline_mode = #tpu.pipeline_mode<synchronous>, transform_indices = @transform_5, window_bounds = array<i64: 32, 32>}, {pipeline_mode = #tpu.pipeline_mode<synchronous>, transform_indices = @transform_6, window_bounds = array<i64: 32, 32>}, {pipeline_mode = #tpu.pipeline_mode<synchronous>, transform_indices = @transform_7, window_bounds = array<i64: 1, 32>}, {pipeline_mode = #tpu.pipeline_mode<synchronous>, transform_indices = @transform_8, window_bounds = array<i64: 1, 32>}, {pipeline_mode = #tpu.pipeline_mode<synchronous>, transform_indices = @transform_9, window_bounds = array<i64: 1, 32>}, {pipeline_mode = #tpu.pipeline_mode<synchronous>, transform_indices = @transform_10, window_bounds = array<i64: 1, 32>}, {transform_indices = @transform_11, window_bounds = array<i64: 1, 8, 32>}]} {
    %c0 = arith.constant 0 : index
    %c0_0 = arith.constant 0 : index
    %c0_1 = arith.constant 0 : index
    %0 = vector.load %arg1[%c0, %c0_0, %c0_1] : memref<1x8x32xf32, #tpu.memory_space<vmem>>, vector<1x8x32xf32>
    %1 = vector.shape_cast %0 : vector<1x8x32xf32> to vector<8x32xf32>
    %2 = arith.truncf %1 : vector<8x32xf32> to vector<8x32xbf16>
    %c0_2 = arith.constant 0 : index
    %c0_3 = arith.constant 0 : index
    %3 = vector.load %arg4[%c0_2, %c0_3] : memref<32x32xbf16, #tpu.memory_space<vmem>>, vector<32x32xbf16>
    %cst = arith.constant dense<0.000000e+00> : vector<8x32xf32>
    %4 = tpu.matmul %2, %3, %cst {dimension_numbers = #tpu.dot_dimension_numbers<[1], [0], [0], [1], [0, 0, 1, 1], [], []>} : vector<8x32xbf16>, vector<32x32xbf16>, vector<8x32xf32> -> vector<8x32xf32>
    %c0_4 = arith.constant 0 : index
    %c0_5 = arith.constant 0 : index
    %5 = vector.load %arg8[%c0_4, %c0_5] : memref<1x32xf32, #tpu.memory_space<vmem>>, vector<1x32xf32>
    %6 = vector.broadcast %5 : vector<1x32xf32> to vector<8x32xf32>
    %7 = arith.addf %4, %6 : vector<8x32xf32>
    %8 = arith.truncf %7 : vector<8x32xf32> to vector<8x32xbf16>
    %9 = vector.shape_cast %8 : vector<8x32xbf16> to vector<1x8x32xbf16>
    %c0_6 = arith.constant 0 : index
    %c0_7 = arith.constant 0 : index
    %c0_8 = arith.constant 0 : index
    %10 = vector.load %arg2[%c0_6, %c0_7, %c0_8] : memref<1x8x32xf32, #tpu.memory_space<vmem>>, vector<1x8x32xf32>
    %11 = vector.shape_cast %10 : vector<1x8x32xf32> to vector<8x32xf32>
    %12 = arith.truncf %11 : vector<8x32xf32> to vector<8x32xbf16>
    %c0_9 = arith.constant 0 : index
    %c0_10 = arith.constant 0 : index
    %13 = vector.load %arg5[%c0_9, %c0_10] : memref<32x32xbf16, #tpu.memory_space<vmem>>, vector<32x32xbf16>
    %cst_11 = arith.constant dense<0.000000e+00> : vector<8x32xf32>
    %14 = tpu.matmul %12, %13, %cst_11 {dimension_numbers = #tpu.dot_dimension_numbers<[1], [0], [0], [1], [0, 0, 1, 1], [], []>} : vector<8x32xbf16>, vector<32x32xbf16>, vector<8x32xf32> -> vector<8x32xf32>
    %c0_12 = arith.constant 0 : index
    %c0_13 = arith.constant 0 : index
    %15 = vector.load %arg9[%c0_12, %c0_13] : memref<1x32xf32, #tpu.memory_space<vmem>>, vector<1x32xf32>
    %16 = vector.broadcast %15 : vector<1x32xf32> to vector<8x32xf32>
    %17 = arith.addf %14, %16 : vector<8x32xf32>
    %18 = arith.truncf %17 : vector<8x32xf32> to vector<8x32xbf16>
    %19 = vector.shape_cast %18 : vector<8x32xbf16> to vector<1x8x32xbf16>
    %c0_14 = arith.constant 0 : index
    %c0_15 = arith.constant 0 : index
    %c0_16 = arith.constant 0 : index
    %20 = vector.load %arg3[%c0_14, %c0_15, %c0_16] : memref<1x8x32xf32, #tpu.memory_space<vmem>>, vector<1x8x32xf32>
    %21 = vector.shape_cast %20 : vector<1x8x32xf32> to vector<8x32xf32>
    %22 = arith.truncf %21 : vector<8x32xf32> to vector<8x32xbf16>
    %c0_17 = arith.constant 0 : index
    %c0_18 = arith.constant 0 : index
    %23 = vector.load %arg6[%c0_17, %c0_18] : memref<32x32xbf16, #tpu.memory_space<vmem>>, vector<32x32xbf16>
    %cst_19 = arith.constant dense<0.000000e+00> : vector<8x32xf32>
    %24 = tpu.matmul %22, %23, %cst_19 {dimension_numbers = #tpu.dot_dimension_numbers<[1], [0], [0], [1], [0, 0, 1, 1], [], []>} : vector<8x32xbf16>, vector<32x32xbf16>, vector<8x32xf32> -> vector<8x32xf32>
    %c0_20 = arith.constant 0 : index
    %c0_21 = arith.constant 0 : index
    %25 = vector.load %arg10[%c0_20, %c0_21] : memref<1x32xf32, #tpu.memory_space<vmem>>, vector<1x32xf32>
    %26 = vector.broadcast %25 : vector<1x32xf32> to vector<8x32xf32>
    %27 = arith.addf %24, %26 : vector<8x32xf32>
    %28 = arith.truncf %27 : vector<8x32xf32> to vector<8x32xbf16>
    %29 = vector.shape_cast %28 : vector<8x32xbf16> to vector<1x8x32xbf16>
    %cst_22 = arith.constant 0.000000e+00 : f32
    %30 = vector.broadcast %cst_22 : f32 to vector<8x32xf32>
    %31 = vector.extract_strided_slice %9 {offsets = [0, 0, 0], sizes = [1, 8, 8], strides = [1, 1, 1]} : vector<1x8x32xbf16> to vector<1x8x8xbf16>
    %32 = vector.extract_strided_slice %19 {offsets = [0, 0, 0], sizes = [1, 8, 8], strides = [1, 1, 1]} : vector<1x8x32xbf16> to vector<1x8x8xbf16>
    %33 = vector.extract_strided_slice %29 {offsets = [0, 0, 0], sizes = [1, 8, 8], strides = [1, 1, 1]} : vector<1x8x32xbf16> to vector<1x8x8xbf16>
    "tpu.trace_start"() <{level = 10 : i32, message = "bqd,bkd->bqk"}> : () -> ()
    %cst_23 = arith.constant dense<0.000000e+00> : vector<1x8x8xf32>
    %34 = tpu.matmul %31, %32, %cst_23 {dimension_numbers = #tpu.dot_dimension_numbers<[2], [2], [1], [1], [0, 0, 0, 1, 1, 1], [0], [0]>} : vector<1x8x8xbf16>, vector<1x8x8xbf16>, vector<1x8x8xf32> -> vector<1x8x8xf32>
    "tpu.trace_stop"() : () -> ()
    %cst_24 = arith.constant 0.353553385 : f32
    %35 = vector.broadcast %cst_24 : f32 to vector<1x8x8xf32>
    %36 = arith.mulf %34, %35 : vector<1x8x8xf32>
    %cst_25 = arith.constant dense<0xFF800000> : vector<1x8xf32>
    %37 = vector.multi_reduction <maximumf>, %36, %cst_25 [2] : vector<1x8x8xf32> to vector<1x8xf32>
    %38 = vector.shape_cast %37 : vector<1x8xf32> to vector<1x8x1xf32>
    %39 = vector.broadcast %38 : vector<1x8x1xf32> to vector<1x8x8xf32>
    %40 = arith.subf %36, %39 : vector<1x8x8xf32>
    %41 = math.exp %40 : vector<1x8x8xf32>
    %cst_26 = arith.constant dense<0.000000e+00> : vector<1x8xf32>
    %42 = vector.multi_reduction <add>, %41, %cst_26 [2] : vector<1x8x8xf32> to vector<1x8xf32>
    %43 = vector.shape_cast %42 : vector<1x8xf32> to vector<1x8x1xf32>
    %44 = vector.broadcast %43 : vector<1x8x1xf32> to vector<1x8x8xf32>
    %45 = arith.divf %41, %44 : vector<1x8x8xf32>
    %46 = arith.truncf %45 : vector<1x8x8xf32> to vector<1x8x8xbf16>
    "tpu.trace_start"() <{level = 10 : i32, message = "bqk,bkd->bqd"}> : () -> ()
    %cst_27 = arith.constant dense<0.000000e+00> : vector<1x8x8xf32>
    %47 = tpu.matmul %46, %33, %cst_27 {dimension_numbers = #tpu.dot_dimension_numbers<[2], [1], [1], [2], [0, 0, 0, 1, 1, 2], [0], [0]>} : vector<1x8x8xbf16>, vector<1x8x8xbf16>, vector<1x8x8xf32> -> vector<1x8x8xf32>
    "tpu.trace_stop"() : () -> ()
    %48 = vector.shape_cast %47 : vector<1x8x8xf32> to vector<8x8xf32>
    %49 = arith.truncf %48 : vector<8x8xf32> to vector<8x8xbf16>
    %c0_28 = arith.constant 0 : index
    %c0_29 = arith.constant 0 : index
    %50 = vector.load %arg7[%c0_28, %c0_29] : memref<32x32xbf16, #tpu.memory_space<vmem>>, vector<8x32xbf16>
    %cst_30 = arith.constant dense<0.000000e+00> : vector<8x32xf32>
    %51 = tpu.matmul %49, %50, %cst_30 {dimension_numbers = #tpu.dot_dimension_numbers<[1], [0], [0], [1], [0, 0, 1, 1], [], []>} : vector<8x8xbf16>, vector<8x32xbf16>, vector<8x32xf32> -> vector<8x32xf32>
    %52 = arith.addf %30, %51 : vector<8x32xf32>
    %53 = vector.extract_strided_slice %9 {offsets = [0, 0, 8], sizes = [1, 8, 8], strides = [1, 1, 1]} : vector<1x8x32xbf16> to vector<1x8x8xbf16>
    %54 = vector.extract_strided_slice %19 {offsets = [0, 0, 8], sizes = [1, 8, 8], strides = [1, 1, 1]} : vector<1x8x32xbf16> to vector<1x8x8xbf16>
    %55 = vector.extract_strided_slice %29 {offsets = [0, 0, 8], sizes = [1, 8, 8], strides = [1, 1, 1]} : vector<1x8x32xbf16> to vector<1x8x8xbf16>
    "tpu.trace_start"() <{level = 10 : i32, message = "bqd,bkd->bqk"}> : () -> ()
    %cst_31 = arith.constant dense<0.000000e+00> : vector<1x8x8xf32>
    %56 = tpu.matmul %53, %54, %cst_31 {dimension_numbers = #tpu.dot_dimension_numbers<[2], [2], [1], [1], [0, 0, 0, 1, 1, 1], [0], [0]>} : vector<1x8x8xbf16>, vector<1x8x8xbf16>, vector<1x8x8xf32> -> vector<1x8x8xf32>
    "tpu.trace_stop"() : () -> ()
    %cst_32 = arith.constant 0.353553385 : f32
    %57 = vector.broadcast %cst_32 : f32 to vector<1x8x8xf32>
    %58 = arith.mulf %56, %57 : vector<1x8x8xf32>
    %cst_33 = arith.constant dense<0xFF800000> : vector<1x8xf32>
    %59 = vector.multi_reduction <maximumf>, %58, %cst_33 [2] : vector<1x8x8xf32> to vector<1x8xf32>
    %60 = vector.shape_cast %59 : vector<1x8xf32> to vector<1x8x1xf32>
    %61 = vector.broadcast %60 : vector<1x8x1xf32> to vector<1x8x8xf32>
    %62 = arith.subf %58, %61 : vector<1x8x8xf32>
    %63 = math.exp %62 : vector<1x8x8xf32>
    %cst_34 = arith.constant dense<0.000000e+00> : vector<1x8xf32>
    %64 = vector.multi_reduction <add>, %63, %cst_34 [2] : vector<1x8x8xf32> to vector<1x8xf32>
    %65 = vector.shape_cast %64 : vector<1x8xf32> to vector<1x8x1xf32>
    %66 = vector.broadcast %65 : vector<1x8x1xf32> to vector<1x8x8xf32>
    %67 = arith.divf %63, %66 : vector<1x8x8xf32>
    %68 = arith.truncf %67 : vector<1x8x8xf32> to vector<1x8x8xbf16>
    "tpu.trace_start"() <{level = 10 : i32, message = "bqk,bkd->bqd"}> : () -> ()
    %cst_35 = arith.constant dense<0.000000e+00> : vector<1x8x8xf32>
    %69 = tpu.matmul %68, %55, %cst_35 {dimension_numbers = #tpu.dot_dimension_numbers<[2], [1], [1], [2], [0, 0, 0, 1, 1, 2], [0], [0]>} : vector<1x8x8xbf16>, vector<1x8x8xbf16>, vector<1x8x8xf32> -> vector<1x8x8xf32>
    "tpu.trace_stop"() : () -> ()
    %70 = vector.shape_cast %69 : vector<1x8x8xf32> to vector<8x8xf32>
    %71 = arith.truncf %70 : vector<8x8xf32> to vector<8x8xbf16>
    %c8 = arith.constant 8 : index
    %c0_36 = arith.constant 0 : index
    %72 = vector.load %arg7[%c8, %c0_36] : memref<32x32xbf16, #tpu.memory_space<vmem>>, vector<8x32xbf16>
    %cst_37 = arith.constant dense<0.000000e+00> : vector<8x32xf32>
    %73 = tpu.matmul %71, %72, %cst_37 {dimension_numbers = #tpu.dot_dimension_numbers<[1], [0], [0], [1], [0, 0, 1, 1], [], []>} : vector<8x8xbf16>, vector<8x32xbf16>, vector<8x32xf32> -> vector<8x32xf32>
    %74 = arith.addf %52, %73 : vector<8x32xf32>
    %75 = vector.extract_strided_slice %9 {offsets = [0, 0, 16], sizes = [1, 8, 8], strides = [1, 1, 1]} : vector<1x8x32xbf16> to vector<1x8x8xbf16>
    %76 = vector.extract_strided_slice %19 {offsets = [0, 0, 16], sizes = [1, 8, 8], strides = [1, 1, 1]} : vector<1x8x32xbf16> to vector<1x8x8xbf16>
    %77 = vector.extract_strided_slice %29 {offsets = [0, 0, 16], sizes = [1, 8, 8], strides = [1, 1, 1]} : vector<1x8x32xbf16> to vector<1x8x8xbf16>
    "tpu.trace_start"() <{level = 10 : i32, message = "bqd,bkd->bqk"}> : () -> ()
    %cst_38 = arith.constant dense<0.000000e+00> : vector<1x8x8xf32>
    %78 = tpu.matmul %75, %76, %cst_38 {dimension_numbers = #tpu.dot_dimension_numbers<[2], [2], [1], [1], [0, 0, 0, 1, 1, 1], [0], [0]>} : vector<1x8x8xbf16>, vector<1x8x8xbf16>, vector<1x8x8xf32> -> vector<1x8x8xf32>
    "tpu.trace_stop"() : () -> ()
    %cst_39 = arith.constant 0.353553385 : f32
    %79 = vector.broadcast %cst_39 : f32 to vector<1x8x8xf32>
    %80 = arith.mulf %78, %79 : vector<1x8x8xf32>
    %cst_40 = arith.constant dense<0xFF800000> : vector<1x8xf32>
    %81 = vector.multi_reduction <maximumf>, %80, %cst_40 [2] : vector<1x8x8xf32> to vector<1x8xf32>
    %82 = vector.shape_cast %81 : vector<1x8xf32> to vector<1x8x1xf32>
    %83 = vector.broadcast %82 : vector<1x8x1xf32> to vector<1x8x8xf32>
    %84 = arith.subf %80, %83 : vector<1x8x8xf32>
    %85 = math.exp %84 : vector<1x8x8xf32>
    %cst_41 = arith.constant dense<0.000000e+00> : vector<1x8xf32>
    %86 = vector.multi_reduction <add>, %85, %cst_41 [2] : vector<1x8x8xf32> to vector<1x8xf32>
    %87 = vector.shape_cast %86 : vector<1x8xf32> to vector<1x8x1xf32>
    %88 = vector.broadcast %87 : vector<1x8x1xf32> to vector<1x8x8xf32>
    %89 = arith.divf %85, %88 : vector<1x8x8xf32>
    %90 = arith.truncf %89 : vector<1x8x8xf32> to vector<1x8x8xbf16>
    "tpu.trace_start"() <{level = 10 : i32, message = "bqk,bkd->bqd"}> : () -> ()
    %cst_42 = arith.constant dense<0.000000e+00> : vector<1x8x8xf32>
    %91 = tpu.matmul %90, %77, %cst_42 {dimension_numbers = #tpu.dot_dimension_numbers<[2], [1], [1], [2], [0, 0, 0, 1, 1, 2], [0], [0]>} : vector<1x8x8xbf16>, vector<1x8x8xbf16>, vector<1x8x8xf32> -> vector<1x8x8xf32>
    "tpu.trace_stop"() : () -> ()
    %92 = vector.shape_cast %91 : vector<1x8x8xf32> to vector<8x8xf32>
    %93 = arith.truncf %92 : vector<8x8xf32> to vector<8x8xbf16>
    %c16 = arith.constant 16 : index
    %c0_43 = arith.constant 0 : index
    %94 = vector.load %arg7[%c16, %c0_43] : memref<32x32xbf16, #tpu.memory_space<vmem>>, vector<8x32xbf16>
    %cst_44 = arith.constant dense<0.000000e+00> : vector<8x32xf32>
    %95 = tpu.matmul %93, %94, %cst_44 {dimension_numbers = #tpu.dot_dimension_numbers<[1], [0], [0], [1], [0, 0, 1, 1], [], []>} : vector<8x8xbf16>, vector<8x32xbf16>, vector<8x32xf32> -> vector<8x32xf32>
    %96 = arith.addf %74, %95 : vector<8x32xf32>
    %97 = vector.extract_strided_slice %9 {offsets = [0, 0, 24], sizes = [1, 8, 8], strides = [1, 1, 1]} : vector<1x8x32xbf16> to vector<1x8x8xbf16>
    %98 = vector.extract_strided_slice %19 {offsets = [0, 0, 24], sizes = [1, 8, 8], strides = [1, 1, 1]} : vector<1x8x32xbf16> to vector<1x8x8xbf16>
    %99 = vector.extract_strided_slice %29 {offsets = [0, 0, 24], sizes = [1, 8, 8], strides = [1, 1, 1]} : vector<1x8x32xbf16> to vector<1x8x8xbf16>
    "tpu.trace_start"() <{level = 10 : i32, message = "bqd,bkd->bqk"}> : () -> ()
    %cst_45 = arith.constant dense<0.000000e+00> : vector<1x8x8xf32>
    %100 = tpu.matmul %97, %98, %cst_45 {dimension_numbers = #tpu.dot_dimension_numbers<[2], [2], [1], [1], [0, 0, 0, 1, 1, 1], [0], [0]>} : vector<1x8x8xbf16>, vector<1x8x8xbf16>, vector<1x8x8xf32> -> vector<1x8x8xf32>
    "tpu.trace_stop"() : () -> ()
    %cst_46 = arith.constant 0.353553385 : f32
    %101 = vector.broadcast %cst_46 : f32 to vector<1x8x8xf32>
    %102 = arith.mulf %100, %101 : vector<1x8x8xf32>
    %cst_47 = arith.constant dense<0xFF800000> : vector<1x8xf32>
    %103 = vector.multi_reduction <maximumf>, %102, %cst_47 [2] : vector<1x8x8xf32> to vector<1x8xf32>
    %104 = vector.shape_cast %103 : vector<1x8xf32> to vector<1x8x1xf32>
    %105 = vector.broadcast %104 : vector<1x8x1xf32> to vector<1x8x8xf32>
    %106 = arith.subf %102, %105 : vector<1x8x8xf32>
    %107 = math.exp %106 : vector<1x8x8xf32>
    %cst_48 = arith.constant dense<0.000000e+00> : vector<1x8xf32>
    %108 = vector.multi_reduction <add>, %107, %cst_48 [2] : vector<1x8x8xf32> to vector<1x8xf32>
    %109 = vector.shape_cast %108 : vector<1x8xf32> to vector<1x8x1xf32>
    %110 = vector.broadcast %109 : vector<1x8x1xf32> to vector<1x8x8xf32>
    %111 = arith.divf %107, %110 : vector<1x8x8xf32>
    %112 = arith.truncf %111 : vector<1x8x8xf32> to vector<1x8x8xbf16>
    "tpu.trace_start"() <{level = 10 : i32, message = "bqk,bkd->bqd"}> : () -> ()
    %cst_49 = arith.constant dense<0.000000e+00> : vector<1x8x8xf32>
    %113 = tpu.matmul %112, %99, %cst_49 {dimension_numbers = #tpu.dot_dimension_numbers<[2], [1], [1], [2], [0, 0, 0, 1, 1, 2], [0], [0]>} : vector<1x8x8xbf16>, vector<1x8x8xbf16>, vector<1x8x8xf32> -> vector<1x8x8xf32>
    "tpu.trace_stop"() : () -> ()
    %114 = vector.shape_cast %113 : vector<1x8x8xf32> to vector<8x8xf32>
    %115 = arith.truncf %114 : vector<8x8xf32> to vector<8x8xbf16>
    %c24 = arith.constant 24 : index
    %c0_50 = arith.constant 0 : index
    %116 = vector.load %arg7[%c24, %c0_50] : memref<32x32xbf16, #tpu.memory_space<vmem>>, vector<8x32xbf16>
    %cst_51 = arith.constant dense<0.000000e+00> : vector<8x32xf32>
    %117 = tpu.matmul %115, %116, %cst_51 {dimension_numbers = #tpu.dot_dimension_numbers<[1], [0], [0], [1], [0, 0, 1, 1], [], []>} : vector<8x8xbf16>, vector<8x32xbf16>, vector<8x32xf32> -> vector<8x32xf32>
    %118 = arith.addf %96, %117 : vector<8x32xf32>
    %c0_52 = arith.constant 0 : index
    %c0_53 = arith.constant 0 : index
    %119 = vector.load %arg11[%c0_52, %c0_53] : memref<1x32xf32, #tpu.memory_space<vmem>>, vector<1x32xf32>
    %120 = vector.broadcast %119 : vector<1x32xf32> to vector<8x32xf32>
    %121 = arith.addf %118, %120 : vector<8x32xf32>
    %122 = vector.shape_cast %121 : vector<8x32xf32> to vector<1x8x32xf32>
    %c0_54 = arith.constant 0 : index
    %c0_55 = arith.constant 0 : index
    %c0_56 = arith.constant 0 : index
    %123 = vector.load %arg12[%c0_54, %c0_55, %c0_56] : memref<1x8x32xf32, #tpu.memory_space<vmem>>, vector<1x8x32xf32>
    tpu.vector_store %arg12[%c0_54, %c0_55, %c0_56], %122 {strides = array<i32>} : memref<1x8x32xf32, #tpu.memory_space<vmem>>, vector<1x8x32xf32>,
    return
  }
  func.func @transform_0(%arg0: i32) -> (i32, i32, i32) {
    %c0_i32 = arith.constant 0 : i32
    %c0_i32_0 = arith.constant 0 : i32
    %c0_i32_1 = arith.constant 0 : i32
    return %arg0, %c0_i32, %c0_i32_0 : i32, i32, i32
  }
  func.func @transform_1(%arg0: i32) -> (i32, i32, i32) {
    %c0_i32 = arith.constant 0 : i32
    %c0_i32_0 = arith.constant 0 : i32
    %c0_i32_1 = arith.constant 0 : i32
    return %arg0, %c0_i32, %c0_i32_0 : i32, i32, i32
  }
  func.func @transform_2(%arg0: i32) -> (i32, i32, i32) {
    %c0_i32 = arith.constant 0 : i32
    %c0_i32_0 = arith.constant 0 : i32
    %c0_i32_1 = arith.constant 0 : i32
    return %arg0, %c0_i32, %c0_i32_0 : i32, i32, i32
  }
  func.func @transform_3(%arg0: i32) -> (i32, i32) {
    %c0_i32 = arith.constant 0 : i32
    %c0_i32_0 = arith.constant 0 : i32
    %c0_i32_1 = arith.constant 0 : i32
    return %c0_i32, %c0_i32_0 : i32, i32
  }
  func.func @transform_4(%arg0: i32) -> (i32, i32) {
    %c0_i32 = arith.constant 0 : i32
    %c0_i32_0 = arith.constant 0 : i32
    %c0_i32_1 = arith.constant 0 : i32
    return %c0_i32, %c0_i32_0 : i32, i32
  }
  func.func @transform_5(%arg0: i32) -> (i32, i32) {
    %c0_i32 = arith.constant 0 : i32
    %c0_i32_0 = arith.constant 0 : i32
    %c0_i32_1 = arith.constant 0 : i32
    return %c0_i32, %c0_i32_0 : i32, i32
  }
  func.func @transform_6(%arg0: i32) -> (i32, i32) {
    %c0_i32 = arith.constant 0 : i32
    %c0_i32_0 = arith.constant 0 : i32
    %c0_i32_1 = arith.constant 0 : i32
    return %c0_i32, %c0_i32_0 : i32, i32
  }
  func.func @transform_7(%arg0: i32) -> (i32, i32) {
    %c0_i32 = arith.constant 0 : i32
    %c0_i32_0 = arith.constant 0 : i32
    %c0_i32_1 = arith.constant 0 : i32
    return %c0_i32, %c0_i32_0 : i32, i32
  }
  func.func @transform_8(%arg0: i32) -> (i32, i32) {
    %c0_i32 = arith.constant 0 : i32
    %c0_i32_0 = arith.constant 0 : i32
    %c0_i32_1 = arith.constant 0 : i32
    return %c0_i32, %c0_i32_0 : i32, i32
  }
  func.func @transform_9(%arg0: i32) -> (i32, i32) {
    %c0_i32 = arith.constant 0 : i32
    %c0_i32_0 = arith.constant 0 : i32
    %c0_i32_1 = arith.constant 0 : i32
    return %c0_i32, %c0_i32_0 : i32, i32
  }
  func.func @transform_10(%arg0: i32) -> (i32, i32) {
    %c0_i32 = arith.constant 0 : i32
    %c0_i32_0 = arith.constant 0 : i32
    %c0_i32_1 = arith.constant 0 : i32
    return %c0_i32, %c0_i32_0 : i32, i32
  }
  func.func @transform_11(%arg0: i32) -> (i32, i32, i32) {
    %c0_i32 = arith.constant 0 : i32
    %c0_i32_0 = arith.constant 0 : i32
    %c0_i32_1 = arith.constant 0 : i32
    return %arg0, %c0_i32, %c0_i32_0 : i32, i32, i32
  }
}

</mosaic_0001>

<llo_original>
// kernel: tpu_custom_call.1
$region0: #{tpu_custom_call.1}
  #allocation0 [shape = 'u32[]', space=smem, size = 0x4, offset = 0x4, fixed_abs, tag = 'smem constant byte address 0x4 - core index']
  #allocation1 [shape = 'u32[72,128]{1,0:T(1,128)}', space=vmem, size = 0x9000, scoped, tag = 'internal scratch']
  %s0 = inlined_call_operand.hbm [shape: f32[2,8,32], index: 0, kind: input, shape index: {}]
  %s1 = inlined_call_operand.hbm [shape: f32[2,8,32], index: 1, kind: input, shape index: {}]
  %s2 = inlined_call_operand.hbm [shape: f32[2,8,32], index: 2, kind: input, shape index: {}]
  %s3 = inlined_call_operand.hbm [shape: bf16[32,32], index: 3, kind: input, shape index: {}]
  %s4 = inlined_call_operand.hbm [shape: bf16[32,32], index: 4, kind: input, shape index: {}]
  %s5 = inlined_call_operand.hbm [shape: bf16[32,32], index: 5, kind: input, shape index: {}]
  %s6 = inlined_call_operand.hbm [shape: bf16[32,32], index: 6, kind: input, shape index: {}]
  %s7 = inlined_call_operand.vmem [shape: f32[1,32], index: 7, kind: input, shape index: {}]
  %s8 = inlined_call_operand.vmem [shape: f32[1,32], index: 8, kind: input, shape index: {}]
  %s9 = inlined_call_operand.vmem [shape: f32[1,32], index: 9, kind: input, shape index: {}]
  %s10 = inlined_call_operand.vmem [shape: f32[1,32], index: 10, kind: input, shape index: {}]
  %s11 = inlined_call_operand.hbm [shape: f32[2,8,32], index: 11, kind: output, shape index: {}]
  %s12 = sld [smem:[#allocation0]]
  $region105: #{tpu_custom_call.1} parent=0
    _
  %s14 = ssub.s32 1, %s12
  %s15 = scalar_select 0, %s14, %s12
  $region1: #{tpu_custom_call.1} parent=0
    #allocation2 [shape = 'u8[8192]{0}', space=vmem, size = 0x2000, scoped, tag = 'input window, operand 0']
    #allocation3 [shape = 's32[2]{0}', space=sflag, size = 0x8, scoped, tag = 'scoped memory for tpu_custom_call.1']
    #allocation4 [shape = 's32[2]{0}', space=sflag, size = 0x8, scoped, tag = 'scoped memory for tpu_custom_call.1']
    #allocation5 [shape = 'u8[8192]{0}', space=vmem, size = 0x2000, scoped, tag = 'input window, operand 1']
    #allocation6 [shape = 's32[2]{0}', space=sflag, size = 0x8, scoped, tag = 'scoped memory for tpu_custom_call.1']
    #allocation7 [shape = 'u8[8192]{0}', space=vmem, size = 0x2000, scoped, tag = 'input window, operand 2']
    #allocation8 [shape = 'u8[8192]{0}', space=vmem, size = 0x2000, scoped, tag = 'input window, operand 3, single buffered']
    #allocation9 [shape = 's32[1]{0}', space=sflag, size = 0x4, scoped, tag = 'scoped memory for tpu_custom_call.1']
    #allocation10 [shape = 'u8[8192]{0}', space=vmem, size = 0x2000, scoped, tag = 'input window, operand 4, single buffered']
    #allocation11 [shape = 'u8[8192]{0}', space=vmem, size = 0x2000, scoped, tag = 'input window, operand 5, single buffered']
    #allocation12 [shape = 's32[1]{0}', space=sflag, size = 0x4, scoped, tag = 'scoped memory for tpu_custom_call.1']
    #allocation13 [shape = 'u8[8192]{0}', space=vmem, size = 0x2000, scoped, tag = 'input window, operand 6, single buffered']
    #allocation14 [shape = 'u8[8192]{0}', space=vmem, size = 0x2000, scoped, tag = 'output window, operand 0']
    %16 = vsyncpa [#allocation3], 0
    %s17 = scalar_lea.sflag [#allocation3], 1
    %18 = vsyncpa %s17, 0
    %19 = vsyncpa [#allocation6], 0
    %s20 = scalar_lea.sflag [#allocation6], 1
    %21 = vsyncpa %s20, 0
    %22 = vsyncpa [#allocation9], 0
    %23 = vsyncpa [#allocation12], 0
    %24 = vsyncpa [#allocation4], 0
    %s25 = scalar_lea.sflag [#allocation4], 1
    %26 = vsyncpa %s25, 0
    loop: start=0, step=1, limit=4
    $region2: #{tpu_custom_call.1} parent=1 // loop_pre_header
      _
    $region3: #{tpu_custom_call.1} parent=1 // loop_header
      %s28 = sphi 0, %s32
      %p29 = scmp.ge.s32.totalorder %s28, 4
      %s38 = sphi 0, %s40
      %s41 = sphi 0, %s38
      %s42 = sphi 0, %s41
      %s58 = sphi 0, %s42
      %s64 = sphi 0, %s66
      %s67 = sphi 0, %s64
      %s68 = sphi 0, %s67
      %s84 = sphi 0, %s68
      %s90 = sphi 0, %s92
      %s93 = sphi 0, %s90
      %s94 = sphi 0, %s93
      %s110 = sphi 0, %s94
      %s114 = sphi 0, %s114
      %s116 = sphi 0, %s114
      %s117 = sphi 0, %s116
      %s131 = sphi 0, %s117
      %s135 = sphi 0, %s135
      %s137 = sphi 0, %s135
      %s138 = sphi 0, %s137
      %s152 = sphi 0, %s138
      %s156 = sphi 0, %s156
      %s158 = sphi 0, %s156
      %s159 = sphi 0, %s158
      %s173 = sphi 0, %s159
      %s177 = sphi 0, %s177
      %s179 = sphi 0, %s177
      %s180 = sphi 0, %s179
      %s194 = sphi 0, %s180
      %s198 = sphi 0, %s198
      %s200 = sphi 0, %s198
      %s201 = sphi 0, %s200
      %s215 = sphi 0, %s201
      %s219 = sphi 0, %s219
      %s221 = sphi 0, %s219
      %s222 = sphi 0, %s221
      %s236 = sphi 0, %s222
      %s240 = sphi 0, %s240
      %s242 = sphi 0, %s240
      %s243 = sphi 0, %s242
      %s257 = sphi 0, %s243
      %s261 = sphi 0, %s261
      %s263 = sphi 0, %s261
      %s264 = sphi 0, %s263
      %s278 = sphi 0, %s264
      %s284 = sphi 0, %s286
      %s287 = sphi 0, %s284
      %s288 = sphi 0, %s287
      %s304 = sphi 0, %s288
    $region4: #{tpu_custom_call.1} parent=1 // loop_header_branch
      %31 = sbr.rel (%p29) target = $region8
    $region5: #{tpu_custom_call.1} parent=1 // loop_body
      %s33 = ssub.s32 %s28, 1
      %s34 = ssub.s32 %s28, 2
      %s35 = sadd.s32 %s28, 1
      %s36 = ssub.s32 %s28, %s35
      %p37 = scmp.eq.s32.totalorder %s36, 0
      %s39 = sadd.s32 %s38, 1
      %s40 = scalar_select %p37, %s38, %s39
      %p43 = pneg %p37
      %p44 = scmp.eq.s32.totalorder %s28, 1
      %p45 = por %p43, %p44
      %p46 = scmp.ne.s32.totalorder %s38, %s41
      %p47 = scmp.eq.s32.totalorder %s28, 0
      %p48 = por %p46, %p47
      %p49 = scmp.ne.s32.totalorder %s38, %s41
      %p50 = scmp.eq.s32.totalorder %s33, 1
      %p51 = por %p49, %p50
      %p52 = scmp.ne.s32.totalorder %s41, %s42
      %p53 = scmp.eq.s32.totalorder %s33, 0
      %p54 = por %p52, %p53
      %p55 = scmp.ne.s32.totalorder %s41, %s42
      %p56 = scmp.eq.s32.totalorder %s34, 1
      %p57 = por %p55, %p56
      %p59 = scmp.ne.s32.totalorder %s42, %s58
      %p60 = scmp.eq.s32.totalorder %s34, 0
      %p61 = por %p59, %p60
      %s62 = ssub.s32 %s28, %s35
      %p63 = scmp.eq.s32.totalorder %s62, 0
      %s65 = sadd.s32 %s64, 1
      %s66 = scalar_select %p63, %s64, %s65
      %p69 = pneg %p63
      %p70 = scmp.eq.s32.totalorder %s28, 1
      %p71 = por %p69, %p70
      %p72 = scmp.ne.s32.totalorder %s64, %s67
      %p73 = scmp.eq.s32.totalorder %s28, 0
      %p74 = por %p72, %p73
      %p75 = scmp.ne.s32.totalorder %s64, %s67
      %p76 = scmp.eq.s32.totalorder %s33, 1
      %p77 = por %p75, %p76
      %p78 = scmp.ne.s32.totalorder %s67, %s68
      %p79 = scmp.eq.s32.totalorder %s33, 0
      %p80 = por %p78, %p79
      %p81 = scmp.ne.s32.totalorder %s67, %s68
      %p82 = scmp.eq.s32.totalorder %s34, 1
      %p83 = por %p81, %p82
      %p85 = scmp.ne.s32.totalorder %s68, %s84
      %p86 = scmp.eq.s32.totalorder %s34, 0
      %p87 = por %p85, %p86
      %s88 = ssub.s32 %s28, %s35
      %p89 = scmp.eq.s32.totalorder %s88, 0
      %s91 = sadd.s32 %s90, 1
      %s92 = scalar_select %p89, %s90, %s91
      %p95 = pneg %p89
      %p96 = scmp.eq.s32.totalorder %s28, 1
      %p97 = por %p95, %p96
      %p98 = scmp.ne.s32.totalorder %s90, %s93
      %p99 = scmp.eq.s32.totalorder %s28, 0
      %p100 = por %p98, %p99
      %p101 = scmp.ne.s32.totalorder %s90, %s93
      %p102 = scmp.eq.s32.totalorder %s33, 1
      %p103 = por %p101, %p102
      %p104 = scmp.ne.s32.totalorder %s93, %s94
      %p105 = scmp.eq.s32.totalorder %s33, 0
      %p106 = por %p104, %p105
      %p107 = scmp.ne.s32.totalorder %s93, %s94
      %p108 = scmp.eq.s32.totalorder %s34, 1
      %p109 = por %p107, %p108
      %p111 = scmp.ne.s32.totalorder %s94, %s110
      %p112 = scmp.eq.s32.totalorder %s34, 0
      %p113 = por %p111, %p112
      %s115 = sadd.s32 %s114, 1
      %p118 = scmp.eq.s32.totalorder %s28, 1
      %p119 = scmp.ne.s32.totalorder %s114, %s116
      %p120 = scmp.eq.s32.totalorder %s28, 0
      %p121 = por %p119, %p120
      %p122 = scmp.ne.s32.totalorder %s114, %s116
      %p123 = scmp.eq.s32.totalorder %s33, 1
      %p124 = por %p122, %p123
      %p125 = scmp.ne.s32.totalorder %s116, %s117
      %p126 = scmp.eq.s32.totalorder %s33, 0
      %p127 = por %p125, %p126
      %p128 = scmp.ne.s32.totalorder %s116, %s117
      %p129 = scmp.eq.s32.totalorder %s34, 1
      %p130 = por %p128, %p129
      %p132 = scmp.ne.s32.totalorder %s117, %s131
      %p133 = scmp.eq.s32.totalorder %s34, 0
      %p134 = por %p132, %p133
      %s136 = sadd.s32 %s135, 1
      %p139 = scmp.eq.s32.totalorder %s28, 1
      %p140 = scmp.ne.s32.totalorder %s135, %s137
      %p141 = scmp.eq.s32.totalorder %s28, 0
      %p142 = por %p140, %p141
      %p143 = scmp.ne.s32.totalorder %s135, %s137
      %p144 = scmp.eq.s32.totalorder %s33, 1
      %p145 = por %p143, %p144
      %p146 = scmp.ne.s32.totalorder %s137, %s138
      %p147 = scmp.eq.s32.totalorder %s33, 0
      %p148 = por %p146, %p147
      %p149 = scmp.ne.s32.totalorder %s137, %s138
      %p150 = scmp.eq.s32.totalorder %s34, 1
      %p151 = por %p149, %p150
      %p153 = scmp.ne.s32.totalorder %s138, %s152
      %p154 = scmp.eq.s32.totalorder %s34, 0
      %p155 = por %p153, %p154
      %s157 = sadd.s32 %s156, 1
      %p160 = scmp.eq.s32.totalorder %s28, 1
      %p161 = scmp.ne.s32.totalorder %s156, %s158
      %p162 = scmp.eq.s32.totalorder %s28, 0
      %p163 = por %p161, %p162
      %p164 = scmp.ne.s32.totalorder %s156, %s158
      %p165 = scmp.eq.s32.totalorder %s33, 1
      %p166 = por %p164, %p165
      %p167 = scmp.ne.s32.totalorder %s158, %s159
      %p168 = scmp.eq.s32.totalorder %s33, 0
      %p169 = por %p167, %p168
      %p170 = scmp.ne.s32.totalorder %s158, %s159
      %p171 = scmp.eq.s32.totalorder %s34, 1
      %p172 = por %p170, %p171
      %p174 = scmp.ne.s32.totalorder %s159, %s173
      %p175 = scmp.eq.s32.totalorder %s34, 0
      %p176 = por %p174, %p175
      %s178 = sadd.s32 %s177, 1
      %p181 = scmp.eq.s32.totalorder %s28, 1
      %p182 = scmp.ne.s32.totalorder %s177, %s179
      %p183 = scmp.eq.s32.totalorder %s28, 0
      %p184 = por %p182, %p183
      %p185 = scmp.ne.s32.totalorder %s177, %s179
      %p186 = scmp.eq.s32.totalorder %s33, 1
      %p187 = por %p185, %p186
      %p188 = scmp.ne.s32.totalorder %s179, %s180
      %p189 = scmp.eq.s32.totalorder %s33, 0
      %p190 = por %p188, %p189
      %p191 = scmp.ne.s32.totalorder %s179, %s180
      %p192 = scmp.eq.s32.totalorder %s34, 1
      %p193 = por %p191, %p192
      %p195 = scmp.ne.s32.totalorder %s180, %s194
      %p196 = scmp.eq.s32.totalorder %s34, 0
      %p197 = por %p195, %p196
      %s199 = sadd.s32 %s198, 1
      %p202 = scmp.eq.s32.totalorder %s28, 1
      %p203 = scmp.ne.s32.totalorder %s198, %s200
      %p204 = scmp.eq.s32.totalorder %s28, 0
      %p205 = por %p203, %p204
      %p206 = scmp.ne.s32.totalorder %s198, %s200
      %p207 = scmp.eq.s32.totalorder %s33, 1
      %p208 = por %p206, %p207
      %p209 = scmp.ne.s32.totalorder %s200, %s201
      %p210 = scmp.eq.s32.totalorder %s33, 0
      %p211 = por %p209, %p210
      %p212 = scmp.ne.s32.totalorder %s200, %s201
      %p213 = scmp.eq.s32.totalorder %s34, 1
      %p214 = por %p212, %p213
      %p216 = scmp.ne.s32.totalorder %s201, %s215
      %p217 = scmp.eq.s32.totalorder %s34, 0
      %p218 = por %p216, %p217
      %s220 = sadd.s32 %s219, 1
      %p223 = scmp.eq.s32.totalorder %s28, 1
      %p224 = scmp.ne.s32.totalorder %s219, %s221
      %p225 = scmp.eq.s32.totalorder %s28, 0
      %p226 = por %p224, %p225
      %p227 = scmp.ne.s32.totalorder %s219, %s221
      %p228 = scmp.eq.s32.totalorder %s33, 1
      %p229 = por %p227, %p228
      %p230 = scmp.ne.s32.totalorder %s221, %s222
      %p231 = scmp.eq.s32.totalorder %s33, 0
      %p232 = por %p230, %p231
      %p233 = scmp.ne.s32.totalorder %s221, %s222
      %p234 = scmp.eq.s32.totalorder %s34, 1
      %p235 = por %p233, %p234
      %p237 = scmp.ne.s32.totalorder %s222, %s236
      %p238 = scmp.eq.s32.totalorder %s34, 0
      %p239 = por %p237, %p238
      %s241 = sadd.s32 %s240, 1
      %p244 = scmp.eq.s32.totalorder %s28, 1
      %p245 = scmp.ne.s32.totalorder %s240, %s242
      %p246 = scmp.eq.s32.totalorder %s28, 0
      %p247 = por %p245, %p246
      %p248 = scmp.ne.s32.totalorder %s240, %s242
      %p249 = scmp.eq.s32.totalorder %s33, 1
      %p250 = por %p248, %p249
      %p251 = scmp.ne.s32.totalorder %s242, %s243
      %p252 = scmp.eq.s32.totalorder %s33, 0
      %p253 = por %p251, %p252
      %p254 = scmp.ne.s32.totalorder %s242, %s243
      %p255 = scmp.eq.s32.totalorder %s34, 1
      %p256 = por %p254, %p255
      %p258 = scmp.ne.s32.totalorder %s243, %s257
      %p259 = scmp.eq.s32.totalorder %s34, 0
      %p260 = por %p258, %p259
      %s262 = sadd.s32 %s261, 1
      %p265 = scmp.eq.s32.totalorder %s28, 1
      %p266 = scmp.ne.s32.totalorder %s261, %s263
      %p267 = scmp.eq.s32.totalorder %s28, 0
      %p268 = por %p266, %p267
      %p269 = scmp.ne.s32.totalorder %s261, %s263
      %p270 = scmp.eq.s32.totalorder %s33, 1
      %p271 = por %p269, %p270
      %p272 = scmp.ne.s32.totalorder %s263, %s264
      %p273 = scmp.eq.s32.totalorder %s33, 0
      %p274 = por %p272, %p273
      %p275 = scmp.ne.s32.totalorder %s263, %s264
      %p276 = scmp.eq.s32.totalorder %s34, 1
      %p277 = por %p275, %p276
      %p279 = scmp.ne.s32.totalorder %s264, %s278
      %p280 = scmp.eq.s32.totalorder %s34, 0
      %p281 = por %p279, %p280
      %s282 = ssub.s32 %s28, %s35
      %p283 = scmp.eq.s32.totalorder %s282, 0
      %s285 = sadd.s32 %s284, 1
      %s286 = scalar_select %p283, %s284, %s285
      %p289 = pneg %p283
      %p290 = scmp.eq.s32.totalorder %s28, 1
      %p291 = por %p289, %p290
      %p292 = scmp.ne.s32.totalorder %s284, %s287
      %p293 = scmp.eq.s32.totalorder %s28, 0
      %p294 = por %p292, %p293
      %p295 = scmp.ne.s32.totalorder %s284, %s287
      %p296 = scmp.eq.s32.totalorder %s33, 1
      %p297 = por %p295, %p296
      %p298 = scmp.ne.s32.totalorder %s287, %s288
      %p299 = scmp.eq.s32.totalorder %s33, 0
      %p300 = por %p298, %p299
      %p301 = scmp.ne.s32.totalorder %s287, %s288
      %p302 = scmp.eq.s32.totalorder %s34, 1
      %p303 = por %p301, %p302
      %p305 = scmp.ne.s32.totalorder %s288, %s304
      %p306 = scmp.eq.s32.totalorder %s34, 0
      %p307 = por %p305, %p306
      %p308 = scmp.le.s32.totalorder 1, %s28
      %p309 = scmp.lt.s32.totalorder %s28, 3
      %p310 = pnand %p308, %p309
      %p311 = pneg %p310
      // Predicated region
      $region9: #{tpu_custom_call.1} parent=5 // pred_check
        _
      $region10: #{tpu_custom_call.1} parent=5 // pred_check_branch
        %313 = sbr.rel (%p310) target = $region12
      $region11: #{tpu_custom_call.1} parent=5 // pred_region
        %s314 = ssub.s32 %s28, 1
        // Predicated region
        $region13: #{tpu_custom_call.1} parent=11 // pred_check
          %p315 = pneg %p127
        $region14: #{tpu_custom_call.1} parent=11 // pred_check_branch
          %317 = sbr.rel (%p315) target = $region16
        $region15: #{tpu_custom_call.1} parent=11 // pred_region
          %319 = vsyncadd [#allocation9], 0
          %s320 = sshll.u32 %s3, 4
          %s321 = int_to_ptr.hbm [resolvable:$true] %s320
          %s322 = sshll.u32 [#allocation8], 4
          %s323 = int_to_ptr.vmem [resolvable:$true] %s322
          %328 = dma.hbm_to_vmem [thread:$0]  %s321, 256, %s323, [#allocation9], 64, 64, 4
        $region16: #{tpu_custom_call.1} parent=11 // pred_fallthru
          _
        // Predicated region
        $region17: #{tpu_custom_call.1} parent=11 // pred_check
          %p329 = pneg %p148
        $region18: #{tpu_custom_call.1} parent=11 // pred_check_branch
          %331 = sbr.rel (%p329) target = $region20
        $region19: #{tpu_custom_call.1} parent=11 // pred_region
          %333 = vsyncadd [#allocation9], 0
          %s334 = sshll.u32 %s4, 4
          %s335 = int_to_ptr.hbm [resolvable:$true] %s334
          %s336 = sshll.u32 [#allocation10], 4
          %s337 = int_to_ptr.vmem [resolvable:$true] %s336
          %342 = dma.hbm_to_vmem [thread:$0]  %s335, 256, %s337, [#allocation9], 64, 64, 4
        $region20: #{tpu_custom_call.1} parent=11 // pred_fallthru
          _
        // Predicated region
        $region21: #{tpu_custom_call.1} parent=11 // pred_check
          %p343 = pneg %p169
        $region22: #{tpu_custom_call.1} parent=11 // pred_check_branch
          %345 = sbr.rel (%p343) target = $region24
        $region23: #{tpu_custom_call.1} parent=11 // pred_region
          %347 = vsyncadd [#allocation12], 0
          %s348 = sshll.u32 %s5, 4
          %s349 = int_to_ptr.hbm [resolvable:$true] %s348
          %s350 = sshll.u32 [#allocation11], 4
          %s351 = int_to_ptr.vmem [resolvable:$true] %s350
          %356 = dma.hbm_to_vmem [thread:$0]  %s349, 256, %s351, [#allocation12], 64, 64, 4
        $region24: #{tpu_custom_call.1} parent=11 // pred_fallthru
          _
        // Predicated region
        $region25: #{tpu_custom_call.1} parent=11 // pred_check
          %p357 = pneg %p190
        $region26: #{tpu_custom_call.1} parent=11 // pred_check_branch
          %359 = sbr.rel (%p357) target = $region28
        $region27: #{tpu_custom_call.1} parent=11 // pred_region
          %361 = vsyncadd [#allocation12], 0
          %s362 = sshll.u32 %s6, 4
          %s363 = int_to_ptr.hbm [resolvable:$true] %s362
          %s364 = sshll.u32 [#allocation13], 4
          %s365 = int_to_ptr.vmem [resolvable:$true] %s364
          %370 = dma.hbm_to_vmem [thread:$0]  %s363, 256, %s365, [#allocation12], 64, 64, 4
        $region28: #{tpu_custom_call.1} parent=11 // pred_fallthru
          _
        // Predicated region
        $region29: #{tpu_custom_call.1} parent=11 // pred_check
          %p371 = pneg %p211
        $region30: #{tpu_custom_call.1} parent=11 // pred_check_branch
          %373 = sbr.rel (%p371) target = $region32
        $region31: #{tpu_custom_call.1} parent=11 // pred_region
          _
        $region32: #{tpu_custom_call.1} parent=11 // pred_fallthru
          _
        // Predicated region
        $region33: #{tpu_custom_call.1} parent=11 // pred_check
          %p374 = pneg %p232
        $region34: #{tpu_custom_call.1} parent=11 // pred_check_branch
          %376 = sbr.rel (%p374) target = $region36
        $region35: #{tpu_custom_call.1} parent=11 // pred_region
          _
        $region36: #{tpu_custom_call.1} parent=11 // pred_fallthru
          _
        // Predicated region
        $region37: #{tpu_custom_call.1} parent=11 // pred_check
          %p377 = pneg %p253
        $region38: #{tpu_custom_call.1} parent=11 // pred_check_branch
          %379 = sbr.rel (%p377) target = $region40
        $region39: #{tpu_custom_call.1} parent=11 // pred_region
          _
        $region40: #{tpu_custom_call.1} parent=11 // pred_fallthru
          _
        // Predicated region
        $region41: #{tpu_custom_call.1} parent=11 // pred_check
          %p380 = pneg %p274
        $region42: #{tpu_custom_call.1} parent=11 // pred_check_branch
          %382 = sbr.rel (%p380) target = $region44
        $region43: #{tpu_custom_call.1} parent=11 // pred_region
          _
        $region44: #{tpu_custom_call.1} parent=11 // pred_fallthru
          _
      $region12: #{tpu_custom_call.1} parent=5 // pred_fallthru
        _
      %p383 = scmp.lt.s32.totalorder %s28, 2
      // Predicated region
      $region45: #{tpu_custom_call.1} parent=5 // pred_check
        %p384 = pneg %p383
      $region46: #{tpu_custom_call.1} parent=5 // pred_check_branch
        %386 = sbr.rel (%p384) target = $region48
      $region47: #{tpu_custom_call.1} parent=5 // pred_region
        // Predicated region
        $region49: #{tpu_custom_call.1} parent=47 // pred_check
          %p387 = pneg %p48
        $region50: #{tpu_custom_call.1} parent=47 // pred_check_branch
          %389 = sbr.rel (%p387) target = $region52
        $region51: #{tpu_custom_call.1} parent=47 // pred_region
          %s390 = sand.u32 %s38, 1
          %s391 = scalar_lea.sflag [#allocation3], %s390
          %s392 = sand.u32 %s38, 1
          %s393 = smul.addr %s392, 8
          %s394 = scalar_lea.vmem [#allocation2], %s393
          %396 = vsyncadd %s391, 0
          %s397 = smul.addr %s28, 8
          %s398 = scalar_lea.hbm %s0, %s397
          %s400 = sshll.u32 %s398, 4
          %s401 = int_to_ptr.hbm [resolvable:$true] %s400
          %s402 = sshll.u32 %s394, 4
          %s403 = int_to_ptr.vmem [resolvable:$true] %s402
          %405 = dma.hbm_to_vmem [thread:$0]  %s401, 128, %s403, %s391
        $region52: #{tpu_custom_call.1} parent=47 // pred_fallthru
          _
        // Predicated region
        $region53: #{tpu_custom_call.1} parent=47 // pred_check
          %p406 = pneg %p74
        $region54: #{tpu_custom_call.1} parent=47 // pred_check_branch
          %408 = sbr.rel (%p406) target = $region56
        $region55: #{tpu_custom_call.1} parent=47 // pred_region
          %s409 = sand.u32 %s28, 1
          %s410 = scalar_lea.sflag [#allocation6], %s409
          %s411 = sand.u32 %s64, 1
          %s412 = smul.addr %s411, 8
          %s413 = scalar_lea.vmem [#allocation5], %s412
          %415 = vsyncadd %s410, 0
          %s416 = smul.addr %s28, 8
          %s417 = scalar_lea.hbm %s1, %s416
          %s419 = sshll.u32 %s417, 4
          %s420 = int_to_ptr.hbm [resolvable:$true] %s419
          %s421 = sshll.u32 %s413, 4
          %s422 = int_to_ptr.vmem [resolvable:$true] %s421
          %424 = dma.hbm_to_vmem [thread:$0]  %s420, 128, %s422, %s410
        $region56: #{tpu_custom_call.1} parent=47 // pred_fallthru
          _
        // Predicated region
        $region57: #{tpu_custom_call.1} parent=47 // pred_check
          %p425 = pneg %p100
        $region58: #{tpu_custom_call.1} parent=47 // pred_check_branch
          %427 = sbr.rel (%p425) target = $region60
        $region59: #{tpu_custom_call.1} parent=47 // pred_region
          %s428 = sand.u32 %s28, 1
          %s429 = scalar_lea.sflag [#allocation6], %s428
          %s430 = sand.u32 %s90, 1
          %s431 = smul.addr %s430, 8
          %s432 = scalar_lea.vmem [#allocation7], %s431
          %434 = vsyncadd %s429, 0
          %s435 = smul.addr %s28, 8
          %s436 = scalar_lea.hbm %s2, %s435
          %s438 = sshll.u32 %s436, 4
          %s439 = int_to_ptr.hbm [resolvable:$true] %s438
          %s440 = sshll.u32 %s432, 4
          %s441 = int_to_ptr.vmem [resolvable:$true] %s440
          %443 = dma.hbm_to_vmem [thread:$0]  %s439, 128, %s441, %s429
        $region60: #{tpu_custom_call.1} parent=47 // pred_fallthru
          _
      $region48: #{tpu_custom_call.1} parent=5 // pred_fallthru
        _
      %p444 = scmp.le.s32.totalorder 1, %s28
      %p445 = scmp.lt.s32.totalorder %s28, 3
      %p446 = pnand %p444, %p445
      %p447 = pneg %p446
      // Predicated region
      $region61: #{tpu_custom_call.1} parent=5 // pred_check
        _
      $region62: #{tpu_custom_call.1} parent=5 // pred_check_branch
        %449 = sbr.rel (%p446) target = $region64
      $region63: #{tpu_custom_call.1} parent=5 // pred_region
        %s450 = ssub.s32 %s28, 1
        %s451 = sand.u32 %s41, 1
        %s452 = scalar_lea.sflag [#allocation3], %s451
        %s453 = sand.u32 %s41, 1
        %s454 = smul.addr %s453, 8
        %s455 = scalar_lea.vmem [#allocation2], %s454
        // Predicated region
        $region65: #{tpu_custom_call.1} parent=63 // pred_check
          %p456 = pneg %p54
        $region66: #{tpu_custom_call.1} parent=63 // pred_check_branch
          %458 = sbr.rel (%p456) target = $region68
        $region67: #{tpu_custom_call.1} parent=63 // pred_region
          %460 = dma.done %s452, 128
        $region68: #{tpu_custom_call.1} parent=63 // pred_fallthru
          _
        %s461 = sand.u32 %s33, 1
        %s462 = scalar_lea.sflag [#allocation6], %s461
        %s463 = sand.u32 %s67, 1
        %s464 = smul.addr %s463, 8
        %s465 = scalar_lea.vmem [#allocation5], %s464
        // Predicated region
        $region69: #{tpu_custom_call.1} parent=63 // pred_check
          %p466 = pneg %p80
        $region70: #{tpu_custom_call.1} parent=63 // pred_check_branch
          %468 = sbr.rel (%p466) target = $region72
        $region71: #{tpu_custom_call.1} parent=63 // pred_region
          %470 = dma.done %s462, 128
        $region72: #{tpu_custom_call.1} parent=63 // pred_fallthru
          _
        %s471 = sand.u32 %s33, 1
        %s472 = scalar_lea.sflag [#allocation6], %s471
        %s473 = sand.u32 %s93, 1
        %s474 = smul.addr %s473, 8
        %s475 = scalar_lea.vmem [#allocation7], %s474
        // Predicated region
        $region73: #{tpu_custom_call.1} parent=63 // pred_check
          %p476 = pneg %p106
        $region74: #{tpu_custom_call.1} parent=63 // pred_check_branch
          %478 = sbr.rel (%p476) target = $region76
        $region75: #{tpu_custom_call.1} parent=63 // pred_region
          %480 = dma.done %s472, 128
        $region76: #{tpu_custom_call.1} parent=63 // pred_fallthru
          _
        // Predicated region
        $region77: #{tpu_custom_call.1} parent=63 // pred_check
          %p481 = pneg %p127
        $region78: #{tpu_custom_call.1} parent=63 // pred_check_branch
          %483 = sbr.rel (%p481) target = $region80
        $region79: #{tpu_custom_call.1} parent=63 // pred_region
          %485 = dma.done [#allocation9], 256
        $region80: #{tpu_custom_call.1} parent=63 // pred_fallthru
          _
        // Predicated region
        $region81: #{tpu_custom_call.1} parent=63 // pred_check
          %p486 = pneg %p148
        $region82: #{tpu_custom_call.1} parent=63 // pred_check_branch
          %488 = sbr.rel (%p486) target = $region84
        $region83: #{tpu_custom_call.1} parent=63 // pred_region
          %490 = dma.done [#allocation9], 256
        $region84: #{tpu_custom_call.1} parent=63 // pred_fallthru
          _
        // Predicated region
        $region85: #{tpu_custom_call.1} parent=63 // pred_check
          %p491 = pneg %p169
        $region86: #{tpu_custom_call.1} parent=63 // pred_check_branch
          %493 = sbr.rel (%p491) target = $region88
        $region87: #{tpu_custom_call.1} parent=63 // pred_region
          %495 = dma.done [#allocation12], 256
        $region88: #{tpu_custom_call.1} parent=63 // pred_fallthru
          _
        // Predicated region
        $region89: #{tpu_custom_call.1} parent=63 // pred_check
          %p496 = pneg %p190
        $region90: #{tpu_custom_call.1} parent=63 // pred_check_branch
          %498 = sbr.rel (%p496) target = $region92
        $region91: #{tpu_custom_call.1} parent=63 // pred_region
          %500 = dma.done [#allocation12], 256
        $region92: #{tpu_custom_call.1} parent=63 // pred_fallthru
          _
        %s501 = sand.u32 %s41, 1
        %s502 = scalar_lea.sflag [#allocation3], %s501
        %s503 = sand.u32 %s41, 1
        %s504 = smul.addr %s503, 8
        %s505 = scalar_lea.vmem [#allocation2], %s504
        %p506 = pneg %p54
        %p507 = pneg %p51
        %s508 = sand.u32 %s33, 1
        %s509 = scalar_lea.sflag [#allocation6], %s508
        %s510 = sand.u32 %s67, 1
        %s511 = smul.addr %s510, 8
        %s512 = scalar_lea.vmem [#allocation5], %s511
        %p513 = pneg %p80
        %p514 = pneg %p77
        %s515 = sand.u32 %s33, 1
        %s516 = scalar_lea.sflag [#allocation6], %s515
        %s517 = sand.u32 %s93, 1
        %s518 = smul.addr %s517, 8
        %s519 = scalar_lea.vmem [#allocation7], %s518
        %p520 = pneg %p106
        %p521 = pneg %p103
        %p522 = pneg %p127
        %p523 = pneg %p124
        %p524 = pneg %p148
        %p525 = pneg %p145
        %p526 = pneg %p169
        %p527 = pneg %p166
        %p528 = pneg %p190
        %p529 = pneg %p187
        %p530 = pneg %p211
        %p531 = pneg %p208
        %p532 = pneg %p232
        %p533 = pneg %p229
        %p534 = pneg %p253
        %p535 = pneg %p250
        %p536 = pneg %p274
        %p537 = pneg %p271
        %p538 = pneg %p300
        %p539 = pneg %p297
        %s540 = sand.u32 %s287, 1
        %s541 = scalar_lea.sflag [#allocation4], %s540
        %s542 = sand.u32 %s287, 1
        %s543 = smul.addr %s542, 8
        %s544 = scalar_lea.vmem [#allocation14], %s543
        %v546 = vld [vmem:[%s455] sm:$0xff]
        %v547 = vpack.c.bf16 %v546, %v546
        %v548 = vld [vmem:[#allocation8] sm:$0xf]
        %v549 = vld [vmem:[#allocation8 + $0x4] sm:$0xf]
        %v550 = vld [vmem:[#allocation8 + $0x8] sm:$0xf]
        %v551 = vld [vmem:[#allocation8 + $0xc] sm:$0xf]
        %v552 = vld [vmem:[%s7] sm:$0x1]
        %v554 = vperm.slane %v552, 0
        %v560 = vunpack.c.l.b16 %v548
        %v561 = vunpack.c.l.b16 %v549
        %v562 = vunpack.c.l.b16 %v550
        %v563 = vunpack.c.l.b16 %v551
        %v564 = vpack.c.b16 %v561, %v560
        %v565 = vpack.c.b16 %v563, %v562
        %vm568 = vcmask 261120
        %v570 = vsel %vm568, %v547, 0
        %572 = vmatpush.bf16.msra.mxu0 0
        %573 = vmatpush.bf16.msra.mxu0 0
        %574 = vmatpush.bf16.msra.mxu0 0
        %575 = vmatpush.bf16.msra.mxu0 0
        %576 = vmatpush.bf16.msra.mxu0 0
        %577 = vmatpush.bf16.msra.mxu0 0
        %578 = vmatpush.bf16.msra.mxu0 %v565
        %579 = vmatpush.bf16.msra.mxu0 %v564
        %580 = vmatmul.bf16.gmra.mxu0 %v570
        %v581 = vpop.f32.mrf.mxu0
        %v582 = vadd.f32 %v554, %v581
        %v583 = vpop.f32.mrf.mxu0
        %584 = vdwg.mxu0
        %v585 = vpack.c.bf16 %v582, %v582
        %v586 = vld [vmem:[%s465] sm:$0xff]
        %v587 = vpack.c.bf16 %v586, %v586
        %v588 = vld [vmem:[#allocation10] sm:$0xf]
        %v589 = vld [vmem:[#allocation10 + $0x4] sm:$0xf]
        %v590 = vld [vmem:[#allocation10 + $0x8] sm:$0xf]
        %v591 = vld [vmem:[#allocation10 + $0xc] sm:$0xf]
        %v592 = vld [vmem:[%s8] sm:$0x1]
        %v594 = vperm.slane %v592, 0
        %v600 = vunpack.c.l.b16 %v588
        %v601 = vunpack.c.l.b16 %v589
        %v602 = vunpack.c.l.b16 %v590
        %v603 = vunpack.c.l.b16 %v591
        %v604 = vpack.c.b16 %v601, %v600
        %v605 = vpack.c.b16 %v603, %v602
        %v609 = vsel %vm568, %v587, 0
        %611 = vmatpush.bf16.msra.mxu0 0
        %612 = vmatpush.bf16.msra.mxu0 0
        %613 = vmatpush.bf16.msra.mxu0 0
        %614 = vmatpush.bf16.msra.mxu0 0
        %615 = vmatpush.bf16.msra.mxu0 0
        %616 = vmatpush.bf16.msra.mxu0 0
        %617 = vmatpush.bf16.msra.mxu0 %v605
        %618 = vmatpush.bf16.msra.mxu0 %v604
        %619 = vmatmul.bf16.gmra.mxu0 %v609
        %v620 = vpop.f32.mrf.mxu0
        %v621 = vadd.f32 %v594, %v620
        %v622 = vpop.f32.mrf.mxu0
        %623 = vdwg.mxu0
        %v624 = vpack.c.bf16 %v621, %v621
        %v625 = vld [vmem:[%s475] sm:$0xff]
        %v626 = vpack.c.bf16 %v625, %v625
        %v627 = vld [vmem:[#allocation11] sm:$0xf]
        %v628 = vld [vmem:[#allocation11 + $0x4] sm:$0xf]
        %v629 = vld [vmem:[#allocation11 + $0x8] sm:$0xf]
        %v630 = vld [vmem:[#allocation11 + $0xc] sm:$0xf]
        %v631 = vld [vmem:[%s9] sm:$0x1]
        %v633 = vperm.slane %v631, 0
        %v639 = vunpack.c.l.b16 %v627
        %v640 = vunpack.c.l.b16 %v628
        %v641 = vunpack.c.l.b16 %v629
        %v642 = vunpack.c.l.b16 %v630
        %v643 = vpack.c.b16 %v640, %v639
        %v644 = vpack.c.b16 %v642, %v641
        %v648 = vsel %vm568, %v626, 0
        %650 = vmatpush.bf16.msra.mxu0 0
        %651 = vmatpush.bf16.msra.mxu0 0
        %652 = vmatpush.bf16.msra.mxu0 0
        %653 = vmatpush.bf16.msra.mxu0 0
        %654 = vmatpush.bf16.msra.mxu0 0
        %655 = vmatpush.bf16.msra.mxu0 0
        %656 = vmatpush.bf16.msra.mxu0 %v644
        %657 = vmatpush.bf16.msra.mxu0 %v643
        %658 = vmatmul.bf16.gmra.mxu0 %v648
        %v659 = vpop.f32.mrf.mxu0
        %v660 = vadd.f32 %v633, %v659
        %v661 = vpop.f32.mrf.mxu0
        %662 = vdwg.mxu0
        %v663 = vpack.c.bf16 %v660, %v660
        %vm664 = vcmask 64512
        %v666 = vsel %vm664, %v585, 0
        %v669 = vsel %vm664, %v624, 0
        %671 = vmatpush.bf16.xpose.msra.mxu0 0
        %672 = vmatpush.bf16.xpose.msra.mxu0 0
        %673 = vmatpush.bf16.xpose.msra.mxu0 0
        %674 = vmatpush.bf16.xpose.msra.mxu0 0
        %675 = vmatpush.bf16.xpose.msra.mxu0 0
        %676 = vmatpush.bf16.xpose.msra.mxu0 0
        %677 = vmatpush.bf16.xpose.msra.mxu0 0
        %678 = vmatpush.bf16.xpose.msra.mxu0 %v669
        %679 = vmatmul.bf16.gmra.mxu0 %v666
        %v680 = vpop.f32.mrf.mxu0
        %v681 = vadd.f32 0.0, %v680
        %v682 = vpop.f32.mrf.mxu0
        %683 = vdwg.mxu0
        %v684 = vmul.f32 %v681, 0.35355338
        %v685 = vsel %vm664, %v684, -inf
        %686 = vmax.xlane.f32.xlu0 %v685
        %v687 = vpop.xlane.xlu0 %686
        %v688 = vsub.f32 %v684, %v687
        %v689 = vmul.f32 %v688, 1.442695
        %v690 = vpow.pop %v689
        %v691 = vsel %vm664, %v690, 0.0
        %692 = vadd.xlane.f32.xlu0 %v691
        %v693 = vpop.xlane.xlu0 %692
        %v694 = vrcp.pop %v693
        %v695 = vmul.f32 %v693, %v694
        %v696 = vsub.f32 1.0, %v695
        %v697 = vmul.f32 %v694, %v696
        %v698 = vadd.f32 %v694, %v697
        %vm699 = vweird.f32 %v693
        %vm700 = vweird.f32 %v694
        %vm701 = vmor %vm699, %vm700
        %v702 = vsel %vm701, %v694, %v698
        %v703 = vand.u32 2147483647, %v693
        %vm704 = vcmp.eq.f32.partialorder %v703, 8.507059e+37
        %v705 = vand.u32 %v693, 2147483648
        %v706 = vor.u32 1.1754944e-38, %v705
        %v707 = vsel %vm704, %v706, %v702
        %v708 = vmul.f32 %v690, %v707
        %v709 = vpack.c.bf16 %v708, %v708
        %v711 = vsel %vm664, %v709, 0
        %vm713 = vcmask 1043456
        %v715 = vsel %vm713, %v663, 0
        %717 = vmatpush.bf16.msra.mxu0 0
        %718 = vmatpush.bf16.msra.mxu0 0
        %719 = vmatpush.bf16.msra.mxu0 0
        %720 = vmatpush.bf16.msra.mxu0 0
        %721 = vmatpush.bf16.msra.mxu0 0
        %722 = vmatpush.bf16.msra.mxu0 0
        %723 = vmatpush.bf16.msra.mxu0 0
        %724 = vmatpush.bf16.msra.mxu0 %v715
        %725 = vmatmul.bf16.gmra.mxu0 %v711
        %v726 = vpop.f32.mrf.mxu0
        %v727 = vadd.f32 0.0, %v726
        %v728 = vpop.f32.mrf.mxu0
        %729 = vdwg.mxu0
        %v730 = vpack.c.bf16 %v727, %v727
        %v731 = vld [vmem:[#allocation13] sm:$0xf]
        %v733 = vunpack.c.l.b16 %v585
        %v734 = vpack.c.b16 %v733, %v733
        %735 = vrot.lane.b32.xlu0 %v734, 120
        %v736 = vpop.permute.xlu0 %735
        %v738 = vunpack.c.l.b16 %v624
        %v739 = vpack.c.b16 %v738, %v738
        %740 = vrot.lane.b32.xlu0 %v739, 120
        %v741 = vpop.permute.xlu0 %740
        %v743 = vsel %vm664, %v736, 0
        %v746 = vsel %vm664, %v741, 0
        %748 = vmatpush.bf16.xpose.msra.mxu0 0
        %749 = vmatpush.bf16.xpose.msra.mxu0 0
        %750 = vmatpush.bf16.xpose.msra.mxu0 0
        %751 = vmatpush.bf16.xpose.msra.mxu0 0
        %752 = vmatpush.bf16.xpose.msra.mxu0 0
        %753 = vmatpush.bf16.xpose.msra.mxu0 0
        %754 = vmatpush.bf16.xpose.msra.mxu0 0
        %755 = vmatpush.bf16.xpose.msra.mxu0 %v746
        %756 = vmatmul.bf16.gmra.mxu0 %v743
        %v757 = vpop.f32.mrf.mxu0
        %v758 = vadd.f32 0.0, %v757
        %v759 = vpop.f32.mrf.mxu0
        %760 = vdwg.mxu0
        %v761 = vmul.f32 %v758, 0.35355338
        %v762 = vsel %vm664, %v761, -inf
        %763 = vmax.xlane.f32.xlu0 %v762
        %v764 = vpop.xlane.xlu0 %763
        %v765 = vsub.f32 %v761, %v764
        %v766 = vmul.f32 %v765, 1.442695
        %v767 = vpow.pop %v766
        %v768 = vsel %vm664, %v767, 0.0
        %769 = vadd.xlane.f32.xlu0 %v768
        %v770 = vpop.xlane.xlu0 %769
        %v771 = vrcp.pop %v770
        %v772 = vmul.f32 %v770, %v771
        %v773 = vsub.f32 1.0, %v772
        %v774 = vmul.f32 %v771, %v773
        %v775 = vadd.f32 %v771, %v774
        %vm776 = vweird.f32 %v770
        %vm777 = vweird.f32 %v771
        %vm778 = vmor %vm776, %vm777
        %v779 = vsel %vm778, %v771, %v775
        %v780 = vand.u32 2147483647, %v770
        %vm781 = vcmp.eq.f32.partialorder %v780, 8.507059e+37
        %v782 = vand.u32 %v770, 2147483648
        %v783 = vor.u32 1.1754944e-38, %v782
        %v784 = vsel %vm781, %v783, %v779
        %v785 = vmul.f32 %v767, %v784
        %v786 = vpack.c.bf16 %v785, %v785
        %v788 = vunpack.c.l.b16 %v663
        %v789 = vpack.c.b16 %v788, %v788
        %790 = vrot.lane.b32.xlu0 %v789, 120
        %v791 = vpop.permute.xlu0 %790
        %v793 = vsel %vm664, %v786, 0
        %v796 = vsel %vm713, %v791, 0
        %798 = vmatpush.bf16.msra.mxu0 0
        %799 = vmatpush.bf16.msra.mxu0 0
        %800 = vmatpush.bf16.msra.mxu0 0
        %801 = vmatpush.bf16.msra.mxu0 0
        %802 = vmatpush.bf16.msra.mxu0 0
        %803 = vmatpush.bf16.msra.mxu0 0
        %804 = vmatpush.bf16.msra.mxu0 0
        %805 = vmatpush.bf16.msra.mxu0 %v796
        %806 = vmatmul.bf16.gmra.mxu0 %v793
        %v807 = vpop.f32.mrf.mxu0
        %v808 = vadd.f32 0.0, %v807
        %v809 = vpop.f32.mrf.mxu0
        %810 = vdwg.mxu0
        %v811 = vpack.c.bf16 %v808, %v808
        %v812 = vld [vmem:[#allocation13 + $0x4] sm:$0xf]
        %v814 = vsel %vm664, %v811, 0
        %v817 = vsel %vm713, %v812, 0
        %819 = vmatpush.bf16.msra.mxu0 0
        %820 = vmatpush.bf16.msra.mxu0 0
        %821 = vmatpush.bf16.msra.mxu0 0
        %822 = vmatpush.bf16.msra.mxu0 0
        %823 = vmatpush.bf16.msra.mxu0 0
        %824 = vmatpush.bf16.msra.mxu0 0
        %825 = vmatpush.bf16.msra.mxu0 0
        %826 = vmatpush.bf16.msra.mxu0 %v817
        %827 = vmatmul.bf16.gmra.mxu0 %v814
        %v828 = vpop.f32.mrf.mxu0
        %v829 = vadd.f32 0.0, %v828
        %v830 = vpop.f32.mrf.mxu0
        %831 = vdwg.mxu0
        %v833 = vsel %vm664, %v730, 0
        %v836 = vsel %vm713, %v731, 0
        %838 = vmatpush.bf16.msra.mxu0 0
        %839 = vmatpush.bf16.msra.mxu0 0
        %840 = vmatpush.bf16.msra.mxu0 0
        %841 = vmatpush.bf16.msra.mxu0 0
        %842 = vmatpush.bf16.msra.mxu0 0
        %843 = vmatpush.bf16.msra.mxu0 0
        %844 = vmatpush.bf16.msra.mxu0 0
        %845 = vmatpush.bf16.msra.mxu0 %v836
        %846 = vmatmul.bf16.gmra.mxu0 %v833
        %v847 = vpop.f32.mrf.mxu0
        %v848 = vadd.f32 %v829, %v847
        %v849 = vpop.f32.mrf.mxu0
        %850 = vdwg.mxu0
        %851 = vrot.lane.b32.xlu0 %v734, 112
        %v852 = vpop.permute.xlu0 %851
        %853 = vrot.lane.b32.xlu0 %v739, 112
        %v854 = vpop.permute.xlu0 %853
        %v856 = vsel %vm664, %v852, 0
        %v859 = vsel %vm664, %v854, 0
        %861 = vmatpush.bf16.xpose.msra.mxu0 0
        %862 = vmatpush.bf16.xpose.msra.mxu0 0
        %863 = vmatpush.bf16.xpose.msra.mxu0 0
        %864 = vmatpush.bf16.xpose.msra.mxu0 0
        %865 = vmatpush.bf16.xpose.msra.mxu0 0
        %866 = vmatpush.bf16.xpose.msra.mxu0 0
        %867 = vmatpush.bf16.xpose.msra.mxu0 0
        %868 = vmatpush.bf16.xpose.msra.mxu0 %v859
        %869 = vmatmul.bf16.gmra.mxu0 %v856
        %v870 = vpop.f32.mrf.mxu0
        %v871 = vadd.f32 0.0, %v870
        %v872 = vpop.f32.mrf.mxu0
        %873 = vdwg.mxu0
        %v874 = vmul.f32 %v871, 0.35355338
        %v875 = vsel %vm664, %v874, -inf
        %876 = vmax.xlane.f32.xlu0 %v875
        %v877 = vpop.xlane.xlu0 %876
        %v878 = vsub.f32 %v874, %v877
        %v879 = vmul.f32 %v878, 1.442695
        %v880 = vpow.pop %v879
        %v881 = vsel %vm664, %v880, 0.0
        %882 = vadd.xlane.f32.xlu0 %v881
        %v883 = vpop.xlane.xlu0 %882
        %v884 = vrcp.pop %v883
        %v885 = vmul.f32 %v883, %v884
        %v886 = vsub.f32 1.0, %v885
        %v887 = vmul.f32 %v884, %v886
        %v888 = vadd.f32 %v884, %v887
        %vm889 = vweird.f32 %v883
        %vm890 = vweird.f32 %v884
        %vm891 = vmor %vm889, %vm890
        %v892 = vsel %vm891, %v884, %v888
        %v893 = vand.u32 2147483647, %v883
        %vm894 = vcmp.eq.f32.partialorder %v893, 8.507059e+37
        %v895 = vand.u32 %v883, 2147483648
        %v896 = vor.u32 1.1754944e-38, %v895
        %v897 = vsel %vm894, %v896, %v892
        %v898 = vmul.f32 %v880, %v897
        %v899 = vpack.c.bf16 %v898, %v898
        %900 = vrot.lane.b32.xlu0 %v789, 112
        %v901 = vpop.permute.xlu0 %900
        %v903 = vsel %vm664, %v899, 0
        %v906 = vsel %vm713, %v901, 0
        %908 = vmatpush.bf16.msra.mxu0 0
        %909 = vmatpush.bf16.msra.mxu0 0
        %910 = vmatpush.bf16.msra.mxu0 0
        %911 = vmatpush.bf16.msra.mxu0 0
        %912 = vmatpush.bf16.msra.mxu0 0
        %913 = vmatpush.bf16.msra.mxu0 0
        %914 = vmatpush.bf16.msra.mxu0 0
        %915 = vmatpush.bf16.msra.mxu0 %v906
        %916 = vmatmul.bf16.gmra.mxu0 %v903
        %v917 = vpop.f32.mrf.mxu0
        %v918 = vadd.f32 0.0, %v917
        %v919 = vpop.f32.mrf.mxu0
        %920 = vdwg.mxu0
        %v921 = vpack.c.bf16 %v918, %v918
        %v922 = vld [vmem:[#allocation13 + $0x8] sm:$0xf]
        %v924 = vsel %vm664, %v921, 0
        %v927 = vsel %vm713, %v922, 0
        %929 = vmatpush.bf16.msra.mxu0 0
        %930 = vmatpush.bf16.msra.mxu0 0
        %931 = vmatpush.bf16.msra.mxu0 0
        %932 = vmatpush.bf16.msra.mxu0 0
        %933 = vmatpush.bf16.msra.mxu0 0
        %934 = vmatpush.bf16.msra.mxu0 0
        %935 = vmatpush.bf16.msra.mxu0 0
        %936 = vmatpush.bf16.msra.mxu0 %v927
        %937 = vmatmul.bf16.gmra.mxu0 %v924
        %v938 = vpop.f32.mrf.mxu0
        %v939 = vadd.f32 0.0, %v938
        %v940 = vpop.f32.mrf.mxu0
        %941 = vdwg.mxu0
        %v942 = vadd.f32 %v848, %v939
        %943 = vrot.lane.b32.xlu0 %v734, 104
        %v944 = vpop.permute.xlu0 %943
        %945 = vrot.lane.b32.xlu0 %v739, 104
        %v946 = vpop.permute.xlu0 %945
        %v948 = vsel %vm664, %v944, 0
        %v951 = vsel %vm664, %v946, 0
        %953 = vmatpush.bf16.xpose.msra.mxu0 0
        %954 = vmatpush.bf16.xpose.msra.mxu0 0
        %955 = vmatpush.bf16.xpose.msra.mxu0 0
        %956 = vmatpush.bf16.xpose.msra.mxu0 0
        %957 = vmatpush.bf16.xpose.msra.mxu0 0
        %958 = vmatpush.bf16.xpose.msra.mxu0 0
        %959 = vmatpush.bf16.xpose.msra.mxu0 0
        %960 = vmatpush.bf16.xpose.msra.mxu0 %v951
        %961 = vmatmul.bf16.gmra.mxu0 %v948
        %v962 = vpop.f32.mrf.mxu0
        %v963 = vadd.f32 0.0, %v962
        %v964 = vpop.f32.mrf.mxu0
        %965 = vdwg.mxu0
        %v966 = vmul.f32 %v963, 0.35355338
        %v967 = vsel %vm664, %v966, -inf
        %968 = vmax.xlane.f32.xlu0 %v967
        %v969 = vpop.xlane.xlu0 %968
        %v970 = vsub.f32 %v966, %v969
        %v971 = vmul.f32 %v970, 1.442695
        %v972 = vpow.pop %v971
        %v973 = vsel %vm664, %v972, 0.0
        %974 = vadd.xlane.f32.xlu0 %v973
        %v975 = vpop.xlane.xlu0 %974
        %v976 = vrcp.pop %v975
        %v977 = vmul.f32 %v975, %v976
        %v978 = vsub.f32 1.0, %v977
        %v979 = vmul.f32 %v976, %v978
        %v980 = vadd.f32 %v976, %v979
        %vm981 = vweird.f32 %v975
        %vm982 = vweird.f32 %v976
        %vm983 = vmor %vm981, %vm982
        %v984 = vsel %vm983, %v976, %v980
        %v985 = vand.u32 2147483647, %v975
        %vm986 = vcmp.eq.f32.partialorder %v985, 8.507059e+37
        %v987 = vand.u32 %v975, 2147483648
        %v988 = vor.u32 1.1754944e-38, %v987
        %v989 = vsel %vm986, %v988, %v984
        %v990 = vmul.f32 %v972, %v989
        %v991 = vpack.c.bf16 %v990, %v990
        %992 = vrot.lane.b32.xlu0 %v789, 104
        %v993 = vpop.permute.xlu0 %992
        %v995 = vsel %vm664, %v991, 0
        %v998 = vsel %vm713, %v993, 0
        %1000 = vmatpush.bf16.msra.mxu0 0
        %1001 = vmatpush.bf16.msra.mxu0 0
        %1002 = vmatpush.bf16.msra.mxu0 0
        %1003 = vmatpush.bf16.msra.mxu0 0
        %1004 = vmatpush.bf16.msra.mxu0 0
        %1005 = vmatpush.bf16.msra.mxu0 0
        %1006 = vmatpush.bf16.msra.mxu0 0
        %1007 = vmatpush.bf16.msra.mxu0 %v998
        %1008 = vmatmul.bf16.gmra.mxu0 %v995
        %v1009 = vpop.f32.mrf.mxu0
        %v1010 = vadd.f32 0.0, %v1009
        %v1011 = vpop.f32.mrf.mxu0
        %1012 = vdwg.mxu0
        %v1013 = vpack.c.bf16 %v1010, %v1010
        %v1014 = vld [vmem:[#allocation13 + $0xc] sm:$0xf]
        %v1016 = vsel %vm664, %v1013, 0
        %v1019 = vsel %vm713, %v1014, 0
        %1021 = vmatpush.bf16.msra.mxu0 0
        %1022 = vmatpush.bf16.msra.mxu0 0
        %1023 = vmatpush.bf16.msra.mxu0 0
        %1024 = vmatpush.bf16.msra.mxu0 0
        %1025 = vmatpush.bf16.msra.mxu0 0
        %1026 = vmatpush.bf16.msra.mxu0 0
        %1027 = vmatpush.bf16.msra.mxu0 0
        %1028 = vmatpush.bf16.msra.mxu0 %v1019
        %1029 = vmatmul.bf16.gmra.mxu0 %v1016
        %v1030 = vpop.f32.mrf.mxu0
        %v1031 = vadd.f32 0.0, %v1030
        %v1032 = vpop.f32.mrf.mxu0
        %1033 = vdwg.mxu0
        %v1034 = vadd.f32 %v942, %v1031
        %v1035 = vld [vmem:[%s10] sm:$0x1]
        %v1037 = vperm.slane %v1035, 0
        %v1039 = vadd.f32 %v1034, %v1037
        %1040 = vst.msk [vmem:[%s544] sm:$0xff] %vm568, %v1039
        %s1041 = sand.u32 %s287, 1
        %s1042 = scalar_lea.sflag [#allocation4], %s1041
        %s1043 = sand.u32 %s287, 1
        %s1044 = smul.addr %s1043, 8
        %s1045 = scalar_lea.vmem [#allocation14], %s1044
        // Predicated region
        $region93: #{tpu_custom_call.1} parent=63 // pred_check
          %p1046 = pneg %p297
        $region94: #{tpu_custom_call.1} parent=63 // pred_check_branch
          %1048 = sbr.rel (%p1046) target = $region96
        $region95: #{tpu_custom_call.1} parent=63 // pred_region
          %1050 = vsyncadd %s1042, 0
          %s1051 = smul.addr %s33, 8
          %s1052 = scalar_lea.hbm %s11, %s1051
          %s1054 = sshll.u32 %s1045, 4
          %s1055 = int_to_ptr.vmem [resolvable:$true] %s1054
          %s1056 = sshll.u32 %s1052, 4
          %s1057 = int_to_ptr.hbm [resolvable:$true] %s1056
          %1059 = dma.vmem_to_hbm [thread:$0]  %s1055, 128, %s1057, %s1042
        $region96: #{tpu_custom_call.1} parent=63 // pred_fallthru
          _
      $region64: #{tpu_custom_call.1} parent=5 // pred_fallthru
        _
      %p1060 = scmp.le.s32.totalorder 2, %s28
      // Predicated region
      $region97: #{tpu_custom_call.1} parent=5 // pred_check
        %p1061 = pneg %p1060
      $region98: #{tpu_custom_call.1} parent=5 // pred_check_branch
        %1063 = sbr.rel (%p1061) target = $region100
      $region99: #{tpu_custom_call.1} parent=5 // pred_region
        %s1064 = ssub.s32 %s28, 2
        // Predicated region
        $region101: #{tpu_custom_call.1} parent=99 // pred_check
          %p1065 = pneg %p303
        $region102: #{tpu_custom_call.1} parent=99 // pred_check_branch
          %1067 = sbr.rel (%p1065) target = $region104
        $region103: #{tpu_custom_call.1} parent=99 // pred_region
          %s1068 = sand.u32 %s288, 1
          %s1069 = scalar_lea.sflag [#allocation4], %s1068
          %s1070 = sand.u32 %s288, 1
          %s1071 = smul.addr %s1070, 8
          %s1072 = scalar_lea.vmem [#allocation14], %s1071
          %1074 = dma.done %s1069, 128
        $region104: #{tpu_custom_call.1} parent=99 // pred_fallthru
          _
      $region100: #{tpu_custom_call.1} parent=5 // pred_fallthru
        _
    $region6: #{tpu_custom_call.1} parent=1 // loop_footer
      %s32 = sadd.s32 1, %s28
    $region7: #{tpu_custom_call.1} parent=1 // loop_footer_branch
      %27 = sbr.rel target = $region3
    $region8: #{tpu_custom_call.1} parent=1 // loop_exit
      _
    %1075 = vsyncpa [#allocation3], 1
    %s1076 = scalar_lea.sflag [#allocation3], 1
    %1077 = vsyncpa %s1076, 1
    %1078 = vsyncpa [#allocation6], 1
    %s1079 = scalar_lea.sflag [#allocation6], 1
    %1080 = vsyncpa %s1079, 1
    %1081 = vsyncpa [#allocation9], 1
    %1082 = vsyncpa [#allocation12], 1
    %1083 = vsyncpa [#allocation4], 1
    %s1084 = scalar_lea.sflag [#allocation4], 1
    %1085 = vsyncpa %s1084, 1

</llo_original>
